<compile_context>
chip_gen: v7x
topology: tpu7x:2x2x1
jax: 0.10.0
libtpu: 0.0.40
codegen_flags: <defaults>
</compile_context>

<pallas_src>
import functools

import jax
import jax.numpy as jnp
from jax.experimental import pallas as pl
from jax.experimental.pallas import tpu as pltpu

_SUBLANE = 8    # f32 sublane tile
_LANE = 128     # lane tile


def _round_up(v, m):
    return ((v + m - 1) // m) * m


# ----------------------------------------------------------------------------
# Fused forward kernel (single invocation, everything VMEM/vreg resident)
# ----------------------------------------------------------------------------
def _fused_forward_kernel(n_layers, m_pad, *refs):
    x_ref = refs[0]
    layer_refs = refs[1:1 + 3 * n_layers]
    fc1w_ref, fc1b_ref, fc2w_ref, fc2b_ref, o_ref, flat_ref = refs[1 + 3 * n_layers:]

    # Activations live as a sublane-stacked (c * m_pad, n_nodes) slab:
    # row block ci*m_pad : (ci+1)*m_pad holds channel ci for all batch rows.
    # Input has c == 1, so the input slab is just x (already bf16).
    z_bf = x_ref[...]
    z_f32 = None

    for layer in range(n_layers):
        at_ref = layer_refs[3 * layer + 0]    # (n_in, n_out)            bf16 VMEM
        mix_ref = layer_refs[3 * layer + 1]   # (c_out*m, c_in*m) = W^T⊗I bf16 VMEM
        bcol_ref = layer_refs[3 * layer + 2]  # (c_out*m, 1)              f32 VMEM

        if layer > 0:
            z_bf = z_f32.astype(jnp.bfloat16)

        # Node aggregation for ALL channels at once: one MXU push per layer.
        pooled = jnp.dot(z_bf, at_ref[...],
                         preferred_element_type=jnp.float32)      # (c_in*m, n_out)

        # Channel mix as one MXU matmul against (W^T kron I_m); bias as a
        # single precomputed column broadcast along lanes.
        mixed = jnp.dot(mix_ref[...], pooled.astype(jnp.bfloat16),
                        preferred_element_type=jnp.float32)       # (c_out*m, n_out)
        z_f32 = mixed + bcol_ref[...]
        # activation{layer} = nn.Sequential() -> identity.

    # FC head.  fc.0 consumes the channel-major flattening cur_z.view(N, -1):
    # flat[mm, co*n_last + j] == z[co*m_pad + mm, j].  Assemble it once by
    # lane-concatenating the channel blocks into a small VMEM scratch (masked
    # stores), then do a SINGLE K = c_last*n_last matmul instead of c_last
    # block-dots.
    c_last = z_f32.shape[0] // m_pad
    n_last = z_f32.shape[1]
    for co in range(c_last):
        flat_ref[:, co * n_last:(co + 1) * n_last] = \
            z_f32[co * m_pad:(co + 1) * m_pad, :]
    flat = flat_ref[...].astype(jnp.bfloat16)                     # (m, c*n_last)

    h = jnp.dot(flat, fc1w_ref[...],
                preferred_element_type=jnp.float32) + fc1b_ref[...]

    # fc.1: weight zero-padded to 128 output lanes -> lane-dense (8, 128) store.
    out = jnp.dot(h.astype(jnp.bfloat16), fc2w_ref[...],
                  preferred_element_type=jnp.float32) + fc2b_ref[...]
    o_ref[...] = out.astype(o_ref.dtype)


# ----------------------------------------------------------------------------
# Wrapper: padding, weight repacking (kron mix / bias columns), single call
# ----------------------------------------------------------------------------
@jax.jit
def classifier1_forward(x, params):
    n_layers = len(params["fgl"])
    batch, n0 = x.shape
    hidden, n_classes = params["fc2_w"].shape
    c_last = params["fgl"][-1][1].shape[1]
    n_last = params["fgl"][-1][0].shape[1]

    # Pad batch to the sublane tile (8) and the class dim to the lane tile (128).
    m_pad = _round_up(max(batch, _SUBLANE), _SUBLANE)
    nc_pad = _round_up(max(n_classes, _LANE), _LANE)

    # Input already in bf16 (halves the x DMA); MXU consumes bf16 anyway.
    x_pad = jnp.zeros((m_pad, n0), jnp.bfloat16).at[:batch].set(
        x.astype(jnp.bfloat16))

    vmem = pl.BlockSpec(memory_space=pltpu.MemorySpace.VMEM)
    eye_m = jnp.eye(m_pad, dtype=jnp.float32)

    inputs = [x_pad]
    in_specs = [vmem]
    for a_t, w, b in params["fgl"]:
        # Channel-mix as a matrix acting on the sublane-stacked slab:
        # Mix[co*m + k, ci*m + l] = W[ci, co] * delta(k, l)  ==  W^T kron I_m.
        mix = jnp.kron(w.astype(jnp.float32).T, eye_m).astype(jnp.bfloat16)
        # Bias column: bcol[co*m + k] = b[co]  (one lane-broadcast add/layer).
        bcol = jnp.repeat(b.astype(jnp.float32), m_pad)[:, None]
        inputs += [a_t.astype(jnp.bfloat16), mix, bcol]
        in_specs += [vmem, vmem, vmem]

    fc1w = params["fc1_w"].astype(jnp.bfloat16)
    fc1b = params["fc1_b"].reshape(1, hidden).astype(jnp.float32)
    fc2w = jnp.zeros((hidden, nc_pad), jnp.bfloat16).at[:, :n_classes].set(
        params["fc2_w"].astype(jnp.bfloat16))
    fc2b = jnp.zeros((1, nc_pad), jnp.float32).at[:, :n_classes].set(
        params["fc2_b"].astype(jnp.float32)[None, :])
    inputs += [fc1w, fc1b, fc2w, fc2b]
    in_specs += [vmem, vmem, vmem, vmem]

    out = pl.pallas_call(
        functools.partial(_fused_forward_kernel, n_layers, m_pad),
        out_shape=jax.ShapeDtypeStruct((m_pad, nc_pad), jnp.float32),
        in_specs=in_specs,
        out_specs=vmem,
        scratch_shapes=[pltpu.VMEM((m_pad, c_last * n_last), jnp.float32)],
        # Total resident footprint ~0.7 MiB: no vmem_limit_bytes override needed
        # on any generation (v5e/v6e/v7x).
    )(*inputs)
    return out[:batch, :n_classes]


# ----------------------------------------------------------------------------
# Parameter construction (deterministic, in-script)
# ----------------------------------------------------------------------------
def build_params(key, node_sizes, channel_sizes, n_classes):
    n_fgl = len(node_sizes) - 1
    keys = jax.random.split(key, 2 * n_fgl + 4)
    k = 0
    fgl = []
    for layer in range(n_fgl):
        c_in, c_out = channel_sizes[layer], channel_sizes[layer + 1]
        n_in, n_out = node_sizes[layer], node_sizes[layer + 1]
        ratio = n_in // n_out
        # Ward-tree stand-in adjacency: out node j averages its block of
        # `ratio` consecutive input nodes.  Stored transposed (n_in, n_out),
        # bf16 (1/ratio is exactly representable).
        rows = jnp.repeat(jnp.arange(n_out), ratio)
        cols = jnp.arange(n_out * ratio)
        a_t = (jnp.zeros((n_in, n_out), jnp.float32)
               .at[cols, rows].set(1.0 / ratio)).astype(jnp.bfloat16)
        w = (jax.random.normal(keys[k], (c_in, c_out), jnp.float32)
             / jnp.sqrt(jnp.float32(c_in)))
        k += 1
        b = 0.01 * jax.random.normal(keys[k], (c_out,), jnp.float32)
        k += 1
        fgl.append((a_t, w, b))

    d_flat = channel_sizes[-1] * node_sizes[-1]
    hidden = channel_sizes[-1]
    fc1_w = (jax.random.normal(keys[k], (d_flat, hidden), jnp.float32)
             / jnp.sqrt(jnp.float32(d_flat))).astype(jnp.bfloat16)
    k += 1
    fc1_b = 0.01 * jax.random.normal(keys[k], (hidden,), jnp.float32)
    k += 1
    fc2_w = (jax.random.normal(keys[k], (hidden, n_classes), jnp.float32)
             / jnp.sqrt(jnp.float32(hidden))).astype(jnp.bfloat16)
    k += 1
    fc2_b = 0.01 * jax.random.normal(keys[k], (n_classes,), jnp.float32)

    return {"fgl": fgl, "fc1_w": fc1_w, "fc1_b": fc1_b,
            "fc2_w": fc2_w, "fc2_b": fc2_b}


# ----------------------------------------------------------------------------
# Pure-JAX reference: densified Kronecker operator per FGL layer, channel-major
# flattening (== PyTorch cur_z.view(N, -1)).  Verifies the structured kernel
# against the original dense semantics.
# ----------------------------------------------------------------------------
def reference_forward(x, params):
    z = x.astype(jnp.float32)                       # (N, 1 * n0), channel-major
    for a_t, w, b in params["fgl"]:
        at = a_t.astype(jnp.float32)                # at[i, j] = A[j, i]
        c_in, c_out = w.shape
        n_in, n_out = at.shape
        # B[ci*n_in + i, co*n_out + j] = W[ci, co] * A[j, i]
        b4 = w[:, None, :, None] * at[None, :, None, :]
        bmat = b4.reshape(c_in * n_in, c_out * n_out)
        z = z @ bmat + jnp.repeat(b, n_out)
    h = z @ params["fc1_w"].astype(jnp.float32) + params["fc1_b"]
    return h @ params["fc2_w"].astype(jnp.float32) + params["fc2_b"]


# ----------------------------------------------------------------------------
if __name__ == "__main__":
    # Scaled-down Classifier1 geometry: 3 FGL downsample layers
    # (node_sizes = [in_features, z*16, z*4, z], channel_sizes scaled from
    #  [1, 32, 64, 128]) followed by the 2-layer FC head.
    batch = 2
    z_size = 16
    n_classes = 4
    in_features = 1024
    node_sizes = [in_features, z_size * 16, z_size * 4, z_size]   # 1024,256,64,16
    channel_sizes = [1, 4, 8, 16]

    key = jax.random.PRNGKey(0)
    kx, kp = jax.random.split(key)
    x = jax.random.normal(kx, (batch, in_features), jnp.float32)
    params = build_params(kp, node_sizes, channel_sizes, n_classes)

    out = classifier1_forward(x, params)
    out = jax.block_until_ready(out)

    assert out.shape == (batch, n_classes), out.shape
    ref = reference_forward(x, params)
    assert jnp.all(jnp.isfinite(out))
    assert jnp.allclose(out, ref, rtol=2e-2, atol=2e-2), (out, ref)

    print("KERNEL_OK")
</pallas_src>

<mosaic_0001>
module attributes {stable_mosaic.version = 11 : i64} {
  func.func @_fused_forward_kernel(%arg0: memref<8x1024xbf16, #tpu.memory_space<vmem>>, %arg1: memref<1024x256xbf16, #tpu.memory_space<vmem>>, %arg2: memref<32x8xbf16, #tpu.memory_space<vmem>>, %arg3: memref<32x1xf32, #tpu.memory_space<vmem>>, %arg4: memref<256x64xbf16, #tpu.memory_space<vmem>>, %arg5: memref<64x32xbf16, #tpu.memory_space<vmem>>, %arg6: memref<64x1xf32, #tpu.memory_space<vmem>>, %arg7: memref<64x16xbf16, #tpu.memory_space<vmem>>, %arg8: memref<128x64xbf16, #tpu.memory_space<vmem>>, %arg9: memref<128x1xf32, #tpu.memory_space<vmem>>, %arg10: memref<256x16xbf16, #tpu.memory_space<vmem>>, %arg11: memref<1x16xf32, #tpu.memory_space<vmem>>, %arg12: memref<16x128xbf16, #tpu.memory_space<vmem>>, %arg13: memref<1x128xf32, #tpu.memory_space<vmem>>, %arg14: memref<8x128xf32, #tpu.memory_space<vmem>>, %arg15: memref<8x256xf32, #tpu.memory_space<vmem>>) attributes {dimension_semantics = [], scalar_prefetch = 0 : i64, scratch_operands = 1 : i64, tpu.core_type = #tpu.core_type<tc>} {
    %c0 = arith.constant 0 : index
    %c0_0 = arith.constant 0 : index
    %0 = vector.load %arg0[%c0, %c0_0] : memref<8x1024xbf16, #tpu.memory_space<vmem>>, vector<8x1024xbf16>
    %c0_1 = arith.constant 0 : index
    %c0_2 = arith.constant 0 : index
    %1 = vector.load %arg1[%c0_1, %c0_2] : memref<1024x256xbf16, #tpu.memory_space<vmem>>, vector<1024x256xbf16>
    %cst = arith.constant dense<0.000000e+00> : vector<8x256xf32>
    %2 = tpu.matmul %0, %1, %cst {dimension_numbers = #tpu.dot_dimension_numbers<[1], [0], [0], [1], [0, 0, 1, 1], [], []>} : vector<8x1024xbf16>, vector<1024x256xbf16>, vector<8x256xf32> -> vector<8x256xf32>
    %c0_3 = arith.constant 0 : index
    %c0_4 = arith.constant 0 : index
    %3 = vector.load %arg2[%c0_3, %c0_4] : memref<32x8xbf16, #tpu.memory_space<vmem>>, vector<32x8xbf16>
    %4 = arith.truncf %2 : vector<8x256xf32> to vector<8x256xbf16>
    %cst_5 = arith.constant dense<0.000000e+00> : vector<32x256xf32>
    %5 = tpu.matmul %3, %4, %cst_5 {dimension_numbers = #tpu.dot_dimension_numbers<[1], [0], [0], [1], [0, 0, 1, 1], [], []>} : vector<32x8xbf16>, vector<8x256xbf16>, vector<32x256xf32> -> vector<32x256xf32>
    %c0_6 = arith.constant 0 : index
    %c0_7 = arith.constant 0 : index
    %6 = vector.load %arg3[%c0_6, %c0_7] : memref<32x1xf32, #tpu.memory_space<vmem>>, vector<32x1xf32>
    %7 = vector.broadcast %6 : vector<32x1xf32> to vector<32x256xf32>
    %8 = arith.addf %5, %7 : vector<32x256xf32>
    %9 = arith.truncf %8 : vector<32x256xf32> to vector<32x256xbf16>
    %c0_8 = arith.constant 0 : index
    %c0_9 = arith.constant 0 : index
    %10 = vector.load %arg4[%c0_8, %c0_9] : memref<256x64xbf16, #tpu.memory_space<vmem>>, vector<256x64xbf16>
    %cst_10 = arith.constant dense<0.000000e+00> : vector<32x64xf32>
    %11 = tpu.matmul %9, %10, %cst_10 {dimension_numbers = #tpu.dot_dimension_numbers<[1], [0], [0], [1], [0, 0, 1, 1], [], []>} : vector<32x256xbf16>, vector<256x64xbf16>, vector<32x64xf32> -> vector<32x64xf32>
    %c0_11 = arith.constant 0 : index
    %c0_12 = arith.constant 0 : index
    %12 = vector.load %arg5[%c0_11, %c0_12] : memref<64x32xbf16, #tpu.memory_space<vmem>>, vector<64x32xbf16>
    %13 = arith.truncf %11 : vector<32x64xf32> to vector<32x64xbf16>
    %cst_13 = arith.constant dense<0.000000e+00> : vector<64x64xf32>
    %14 = tpu.matmul %12, %13, %cst_13 {dimension_numbers = #tpu.dot_dimension_numbers<[1], [0], [0], [1], [0, 0, 1, 1], [], []>} : vector<64x32xbf16>, vector<32x64xbf16>, vector<64x64xf32> -> vector<64x64xf32>
    %c0_14 = arith.constant 0 : index
    %c0_15 = arith.constant 0 : index
    %15 = vector.load %arg6[%c0_14, %c0_15] : memref<64x1xf32, #tpu.memory_space<vmem>>, vector<64x1xf32>
    %16 = vector.broadcast %15 : vector<64x1xf32> to vector<64x64xf32>
    %17 = arith.addf %14, %16 : vector<64x64xf32>
    %18 = arith.truncf %17 : vector<64x64xf32> to vector<64x64xbf16>
    %c0_16 = arith.constant 0 : index
    %c0_17 = arith.constant 0 : index
    %19 = vector.load %arg7[%c0_16, %c0_17] : memref<64x16xbf16, #tpu.memory_space<vmem>>, vector<64x16xbf16>
    %cst_18 = arith.constant dense<0.000000e+00> : vector<64x16xf32>
    %20 = tpu.matmul %18, %19, %cst_18 {dimension_numbers = #tpu.dot_dimension_numbers<[1], [0], [0], [1], [0, 0, 1, 1], [], []>} : vector<64x64xbf16>, vector<64x16xbf16>, vector<64x16xf32> -> vector<64x16xf32>
    %c0_19 = arith.constant 0 : index
    %c0_20 = arith.constant 0 : index
    %21 = vector.load %arg8[%c0_19, %c0_20] : memref<128x64xbf16, #tpu.memory_space<vmem>>, vector<128x64xbf16>
    %22 = arith.truncf %20 : vector<64x16xf32> to vector<64x16xbf16>
    %cst_21 = arith.constant dense<0.000000e+00> : vector<128x16xf32>
    %23 = tpu.matmul %21, %22, %cst_21 {dimension_numbers = #tpu.dot_dimension_numbers<[1], [0], [0], [1], [0, 0, 1, 1], [], []>} : vector<128x64xbf16>, vector<64x16xbf16>, vector<128x16xf32> -> vector<128x16xf32>
    %c0_22 = arith.constant 0 : index
    %c0_23 = arith.constant 0 : index
    %24 = vector.load %arg9[%c0_22, %c0_23] : memref<128x1xf32, #tpu.memory_space<vmem>>, vector<128x1xf32>
    %25 = vector.broadcast %24 : vector<128x1xf32> to vector<128x16xf32>
    %26 = arith.addf %23, %25 : vector<128x16xf32>
    %27 = vector.extract_strided_slice %26 {offsets = [0, 0], sizes = [8, 16], strides = [1, 1]} : vector<128x16xf32> to vector<8x16xf32>
    %c0_24 = arith.constant 0 : index
    %c0_25 = arith.constant 0 : index
    %28 = vector.load %arg15[%c0_24, %c0_25] : memref<8x256xf32, #tpu.memory_space<vmem>>, vector<8x16xf32>
    tpu.vector_store %arg15[%c0_24, %c0_25], %27 {strides = array<i32>} : memref<8x256xf32, #tpu.memory_space<vmem>>, vector<8x16xf32>,
    %29 = vector.extract_strided_slice %26 {offsets = [8, 0], sizes = [8, 16], strides = [1, 1]} : vector<128x16xf32> to vector<8x16xf32>
    %c0_26 = arith.constant 0 : index
    %c16 = arith.constant 16 : index
    %30 = vector.load %arg15[%c0_26, %c16] : memref<8x256xf32, #tpu.memory_space<vmem>>, vector<8x16xf32>
    tpu.vector_store %arg15[%c0_26, %c16], %29 {strides = array<i32>} : memref<8x256xf32, #tpu.memory_space<vmem>>, vector<8x16xf32>,
    %31 = vector.extract_strided_slice %26 {offsets = [16, 0], sizes = [8, 16], strides = [1, 1]} : vector<128x16xf32> to vector<8x16xf32>
    %c0_27 = arith.constant 0 : index
    %c32 = arith.constant 32 : index
    %32 = vector.load %arg15[%c0_27, %c32] : memref<8x256xf32, #tpu.memory_space<vmem>>, vector<8x16xf32>
    tpu.vector_store %arg15[%c0_27, %c32], %31 {strides = array<i32>} : memref<8x256xf32, #tpu.memory_space<vmem>>, vector<8x16xf32>,
    %33 = vector.extract_strided_slice %26 {offsets = [24, 0], sizes = [8, 16], strides = [1, 1]} : vector<128x16xf32> to vector<8x16xf32>
    %c0_28 = arith.constant 0 : index
    %c48 = arith.constant 48 : index
    %34 = vector.load %arg15[%c0_28, %c48] : memref<8x256xf32, #tpu.memory_space<vmem>>, vector<8x16xf32>
    tpu.vector_store %arg15[%c0_28, %c48], %33 {strides = array<i32>} : memref<8x256xf32, #tpu.memory_space<vmem>>, vector<8x16xf32>,
    %35 = vector.extract_strided_slice %26 {offsets = [32, 0], sizes = [8, 16], strides = [1, 1]} : vector<128x16xf32> to vector<8x16xf32>
    %c0_29 = arith.constant 0 : index
    %c64 = arith.constant 64 : index
    %36 = vector.load %arg15[%c0_29, %c64] : memref<8x256xf32, #tpu.memory_space<vmem>>, vector<8x16xf32>
    tpu.vector_store %arg15[%c0_29, %c64], %35 {strides = array<i32>} : memref<8x256xf32, #tpu.memory_space<vmem>>, vector<8x16xf32>,
    %37 = vector.extract_strided_slice %26 {offsets = [40, 0], sizes = [8, 16], strides = [1, 1]} : vector<128x16xf32> to vector<8x16xf32>
    %c0_30 = arith.constant 0 : index
    %c80 = arith.constant 80 : index
    %38 = vector.load %arg15[%c0_30, %c80] : memref<8x256xf32, #tpu.memory_space<vmem>>, vector<8x16xf32>
    tpu.vector_store %arg15[%c0_30, %c80], %37 {strides = array<i32>} : memref<8x256xf32, #tpu.memory_space<vmem>>, vector<8x16xf32>,
    %39 = vector.extract_strided_slice %26 {offsets = [48, 0], sizes = [8, 16], strides = [1, 1]} : vector<128x16xf32> to vector<8x16xf32>
    %c0_31 = arith.constant 0 : index
    %c96 = arith.constant 96 : index
    %40 = vector.load %arg15[%c0_31, %c96] : memref<8x256xf32, #tpu.memory_space<vmem>>, vector<8x16xf32>
    tpu.vector_store %arg15[%c0_31, %c96], %39 {strides = array<i32>} : memref<8x256xf32, #tpu.memory_space<vmem>>, vector<8x16xf32>,
    %41 = vector.extract_strided_slice %26 {offsets = [56, 0], sizes = [8, 16], strides = [1, 1]} : vector<128x16xf32> to vector<8x16xf32>
    %c0_32 = arith.constant 0 : index
    %c112 = arith.constant 112 : index
    %42 = vector.load %arg15[%c0_32, %c112] : memref<8x256xf32, #tpu.memory_space<vmem>>, vector<8x16xf32>
    tpu.vector_store %arg15[%c0_32, %c112], %41 {strides = array<i32>} : memref<8x256xf32, #tpu.memory_space<vmem>>, vector<8x16xf32>,
    %43 = vector.extract_strided_slice %26 {offsets = [64, 0], sizes = [8, 16], strides = [1, 1]} : vector<128x16xf32> to vector<8x16xf32>
    %c0_33 = arith.constant 0 : index
    %c128 = arith.constant 128 : index
    %44 = vector.load %arg15[%c0_33, %c128] : memref<8x256xf32, #tpu.memory_space<vmem>>, vector<8x16xf32>
    tpu.vector_store %arg15[%c0_33, %c128], %43 {strides = array<i32>} : memref<8x256xf32, #tpu.memory_space<vmem>>, vector<8x16xf32>,
    %45 = vector.extract_strided_slice %26 {offsets = [72, 0], sizes = [8, 16], strides = [1, 1]} : vector<128x16xf32> to vector<8x16xf32>
    %c0_34 = arith.constant 0 : index
    %c144 = arith.constant 144 : index
    %46 = vector.load %arg15[%c0_34, %c144] : memref<8x256xf32, #tpu.memory_space<vmem>>, vector<8x16xf32>
    tpu.vector_store %arg15[%c0_34, %c144], %45 {strides = array<i32>} : memref<8x256xf32, #tpu.memory_space<vmem>>, vector<8x16xf32>,
    %47 = vector.extract_strided_slice %26 {offsets = [80, 0], sizes = [8, 16], strides = [1, 1]} : vector<128x16xf32> to vector<8x16xf32>
    %c0_35 = arith.constant 0 : index
    %c160 = arith.constant 160 : index
    %48 = vector.load %arg15[%c0_35, %c160] : memref<8x256xf32, #tpu.memory_space<vmem>>, vector<8x16xf32>
    tpu.vector_store %arg15[%c0_35, %c160], %47 {strides = array<i32>} : memref<8x256xf32, #tpu.memory_space<vmem>>, vector<8x16xf32>,
    %49 = vector.extract_strided_slice %26 {offsets = [88, 0], sizes = [8, 16], strides = [1, 1]} : vector<128x16xf32> to vector<8x16xf32>
    %c0_36 = arith.constant 0 : index
    %c176 = arith.constant 176 : index
    %50 = vector.load %arg15[%c0_36, %c176] : memref<8x256xf32, #tpu.memory_space<vmem>>, vector<8x16xf32>
    tpu.vector_store %arg15[%c0_36, %c176], %49 {strides = array<i32>} : memref<8x256xf32, #tpu.memory_space<vmem>>, vector<8x16xf32>,
    %51 = vector.extract_strided_slice %26 {offsets = [96, 0], sizes = [8, 16], strides = [1, 1]} : vector<128x16xf32> to vector<8x16xf32>
    %c0_37 = arith.constant 0 : index
    %c192 = arith.constant 192 : index
    %52 = vector.load %arg15[%c0_37, %c192] : memref<8x256xf32, #tpu.memory_space<vmem>>, vector<8x16xf32>
    tpu.vector_store %arg15[%c0_37, %c192], %51 {strides = array<i32>} : memref<8x256xf32, #tpu.memory_space<vmem>>, vector<8x16xf32>,
    %53 = vector.extract_strided_slice %26 {offsets = [104, 0], sizes = [8, 16], strides = [1, 1]} : vector<128x16xf32> to vector<8x16xf32>
    %c0_38 = arith.constant 0 : index
    %c208 = arith.constant 208 : index
    %54 = vector.load %arg15[%c0_38, %c208] : memref<8x256xf32, #tpu.memory_space<vmem>>, vector<8x16xf32>
    tpu.vector_store %arg15[%c0_38, %c208], %53 {strides = array<i32>} : memref<8x256xf32, #tpu.memory_space<vmem>>, vector<8x16xf32>,
    %55 = vector.extract_strided_slice %26 {offsets = [112, 0], sizes = [8, 16], strides = [1, 1]} : vector<128x16xf32> to vector<8x16xf32>
    %c0_39 = arith.constant 0 : index
    %c224 = arith.constant 224 : index
    %56 = vector.load %arg15[%c0_39, %c224] : memref<8x256xf32, #tpu.memory_space<vmem>>, vector<8x16xf32>
    tpu.vector_store %arg15[%c0_39, %c224], %55 {strides = array<i32>} : memref<8x256xf32, #tpu.memory_space<vmem>>, vector<8x16xf32>,
    %57 = vector.extract_strided_slice %26 {offsets = [120, 0], sizes = [8, 16], strides = [1, 1]} : vector<128x16xf32> to vector<8x16xf32>
    %c0_40 = arith.constant 0 : index
    %c240 = arith.constant 240 : index
    %58 = vector.load %arg15[%c0_40, %c240] : memref<8x256xf32, #tpu.memory_space<vmem>>, vector<8x16xf32>
    tpu.vector_store %arg15[%c0_40, %c240], %57 {strides = array<i32>} : memref<8x256xf32, #tpu.memory_space<vmem>>, vector<8x16xf32>,
    %c0_41 = arith.constant 0 : index
    %c0_42 = arith.constant 0 : index
    %59 = vector.load %arg15[%c0_41, %c0_42] : memref<8x256xf32, #tpu.memory_space<vmem>>, vector<8x256xf32>
    %60 = arith.truncf %59 : vector<8x256xf32> to vector<8x256xbf16>
    %c0_43 = arith.constant 0 : index
    %c0_44 = arith.constant 0 : index
    %61 = vector.load %arg10[%c0_43, %c0_44] : memref<256x16xbf16, #tpu.memory_space<vmem>>, vector<256x16xbf16>
    %cst_45 = arith.constant dense<0.000000e+00> : vector<8x16xf32>
    %62 = tpu.matmul %60, %61, %cst_45 {dimension_numbers = #tpu.dot_dimension_numbers<[1], [0], [0], [1], [0, 0, 1, 1], [], []>} : vector<8x256xbf16>, vector<256x16xbf16>, vector<8x16xf32> -> vector<8x16xf32>
    %c0_46 = arith.constant 0 : index
    %c0_47 = arith.constant 0 : index
    %63 = vector.load %arg11[%c0_46, %c0_47] : memref<1x16xf32, #tpu.memory_space<vmem>>, vector<1x16xf32>
    %64 = vector.broadcast %63 : vector<1x16xf32> to vector<8x16xf32>
    %65 = arith.addf %62, %64 : vector<8x16xf32>
    %66 = arith.truncf %65 : vector<8x16xf32> to vector<8x16xbf16>
    %c0_48 = arith.constant 0 : index
    %c0_49 = arith.constant 0 : index
    %67 = vector.load %arg12[%c0_48, %c0_49] : memref<16x128xbf16, #tpu.memory_space<vmem>>, vector<16x128xbf16>
    %cst_50 = arith.constant dense<0.000000e+00> : vector<8x128xf32>
    %68 = tpu.matmul %66, %67, %cst_50 {dimension_numbers = #tpu.dot_dimension_numbers<[1], [0], [0], [1], [0, 0, 1, 1], [], []>} : vector<8x16xbf16>, vector<16x128xbf16>, vector<8x128xf32> -> vector<8x128xf32>
    %c0_51 = arith.constant 0 : index
    %c0_52 = arith.constant 0 : index
    %69 = vector.load %arg13[%c0_51, %c0_52] : memref<1x128xf32, #tpu.memory_space<vmem>>, vector<1x128xf32>
    %70 = vector.broadcast %69 : vector<1x128xf32> to vector<8x128xf32>
    %71 = arith.addf %68, %70 : vector<8x128xf32>
    %c0_53 = arith.constant 0 : index
    %c0_54 = arith.constant 0 : index
    %72 = vector.load %arg14[%c0_53, %c0_54] : memref<8x128xf32, #tpu.memory_space<vmem>>, vector<8x128xf32>
    tpu.vector_store %arg14[%c0_53, %c0_54], %71 {strides = array<i32>} : memref<8x128xf32, #tpu.memory_space<vmem>>, vector<8x128xf32>,
    return
  }
}

</mosaic_0001>

<llo_original>
// kernel: classifier1_forward.1
$region0: #{classifier1_forward.1}
  #allocation0 [shape = 'u32[]', space=smem, size = 0x4, offset = 0x4, fixed_abs, tag = 'smem constant byte address 0x4 - core index']
  #allocation1 [shape = 'u32[144,128]{1,0:T(1,128)}', space=vmem, size = 0x12000, scoped, tag = 'internal scratch']
  #allocation2 [shape = 'f32[8,256]{1,0:T(8,128)}', space=vmem, size = 0x2000, scoped, tag = 'scratch operand']
  %s0 = inlined_call_operand.vmem [shape: bf16[8,1024], index: 0, kind: input, shape index: {}]
  %s1 = inlined_call_operand.vmem [shape: bf16[1024,256], index: 1, kind: input, shape index: {}]
  %s2 = inlined_call_operand.vmem [shape: bf16[32,8], index: 2, kind: input, shape index: {}]
  %s3 = inlined_call_operand.vmem [shape: f32[32,1], index: 3, kind: input, shape index: {}]
  %s4 = inlined_call_operand.vmem [shape: bf16[256,64], index: 4, kind: input, shape index: {}]
  %s5 = inlined_call_operand.vmem [shape: bf16[64,32], index: 5, kind: input, shape index: {}]
  %s6 = inlined_call_operand.vmem [shape: f32[64,1], index: 6, kind: input, shape index: {}]
  %s7 = inlined_call_operand.vmem [shape: bf16[64,16], index: 7, kind: input, shape index: {}]
  %s8 = inlined_call_operand.vmem [shape: bf16[128,64], index: 8, kind: input, shape index: {}]
  %s9 = inlined_call_operand.vmem [shape: f32[128,1], index: 9, kind: input, shape index: {}]
  %s10 = inlined_call_operand.vmem [shape: bf16[256,16], index: 10, kind: input, shape index: {}]
  %s11 = inlined_call_operand.vmem [shape: f32[1,16], index: 11, kind: input, shape index: {}]
  %s12 = inlined_call_operand.vmem [shape: bf16[16,128], index: 12, kind: input, shape index: {}]
  %s13 = inlined_call_operand.vmem [shape: f32[1,128], index: 13, kind: input, shape index: {}]
  %s14 = inlined_call_operand.vmem [shape: f32[8,128], index: 14, kind: output, shape index: {}]
  %s15 = sld [smem:[#allocation0]]
  $region66: #{classifier1_forward.1} parent=0
    _
  %s17 = ssub.s32 1, %s15
  %s18 = scalar_select 0, %s17, %s15
  // Predicated region
  $region2: #{classifier1_forward.1} parent=0 // pred_check
    _
  $region3: #{classifier1_forward.1} parent=0 // pred_check_branch
    %20 = sbr.rel (0) target = $region5
  $region4: #{classifier1_forward.1} parent=0 // pred_region
    _
  $region5: #{classifier1_forward.1} parent=0 // pred_fallthru
    _
  // Predicated region
  $region6: #{classifier1_forward.1} parent=0 // pred_check
    _
  $region7: #{classifier1_forward.1} parent=0 // pred_check_branch
    %22 = sbr.rel (0) target = $region9
  $region8: #{classifier1_forward.1} parent=0 // pred_region
    _
  $region9: #{classifier1_forward.1} parent=0 // pred_fallthru
    _
  // Predicated region
  $region10: #{classifier1_forward.1} parent=0 // pred_check
    _
  $region11: #{classifier1_forward.1} parent=0 // pred_check_branch
    %24 = sbr.rel (0) target = $region13
  $region12: #{classifier1_forward.1} parent=0 // pred_region
    _
  $region13: #{classifier1_forward.1} parent=0 // pred_fallthru
    _
  // Predicated region
  $region14: #{classifier1_forward.1} parent=0 // pred_check
    _
  $region15: #{classifier1_forward.1} parent=0 // pred_check_branch
    %26 = sbr.rel (0) target = $region17
  $region16: #{classifier1_forward.1} parent=0 // pred_region
    _
  $region17: #{classifier1_forward.1} parent=0 // pred_fallthru
    _
  // Predicated region
  $region18: #{classifier1_forward.1} parent=0 // pred_check
    _
  $region19: #{classifier1_forward.1} parent=0 // pred_check_branch
    %28 = sbr.rel (0) target = $region21
  $region20: #{classifier1_forward.1} parent=0 // pred_region
    _
  $region21: #{classifier1_forward.1} parent=0 // pred_fallthru
    _
  // Predicated region
  $region22: #{classifier1_forward.1} parent=0 // pred_check
    _
  $region23: #{classifier1_forward.1} parent=0 // pred_check_branch
    %30 = sbr.rel (0) target = $region25
  $region24: #{classifier1_forward.1} parent=0 // pred_region
    _
  $region25: #{classifier1_forward.1} parent=0 // pred_fallthru
    _
  // Predicated region
  $region26: #{classifier1_forward.1} parent=0 // pred_check
    _
  $region27: #{classifier1_forward.1} parent=0 // pred_check_branch
    %32 = sbr.rel (0) target = $region29
  $region28: #{classifier1_forward.1} parent=0 // pred_region
    _
  $region29: #{classifier1_forward.1} parent=0 // pred_fallthru
    _
  // Predicated region
  $region30: #{classifier1_forward.1} parent=0 // pred_check
    _
  $region31: #{classifier1_forward.1} parent=0 // pred_check_branch
    %34 = sbr.rel (0) target = $region33
  $region32: #{classifier1_forward.1} parent=0 // pred_region
    _
  $region33: #{classifier1_forward.1} parent=0 // pred_fallthru
    _
  // Predicated region
  $region34: #{classifier1_forward.1} parent=0 // pred_check
    _
  $region35: #{classifier1_forward.1} parent=0 // pred_check_branch
    %36 = sbr.rel (0) target = $region37
  $region36: #{classifier1_forward.1} parent=0 // pred_region
    _
  $region37: #{classifier1_forward.1} parent=0 // pred_fallthru
    _
  // Predicated region
  $region38: #{classifier1_forward.1} parent=0 // pred_check
    _
  $region39: #{classifier1_forward.1} parent=0 // pred_check_branch
    %38 = sbr.rel (0) target = $region41
  $region40: #{classifier1_forward.1} parent=0 // pred_region
    _
  $region41: #{classifier1_forward.1} parent=0 // pred_fallthru
    _
  // Predicated region
  $region42: #{classifier1_forward.1} parent=0 // pred_check
    _
  $region43: #{classifier1_forward.1} parent=0 // pred_check_branch
    %40 = sbr.rel (0) target = $region45
  $region44: #{classifier1_forward.1} parent=0 // pred_region
    _
  $region45: #{classifier1_forward.1} parent=0 // pred_fallthru
    _
  // Predicated region
  $region46: #{classifier1_forward.1} parent=0 // pred_check
    _
  $region47: #{classifier1_forward.1} parent=0 // pred_check_branch
    %42 = sbr.rel (0) target = $region49
  $region48: #{classifier1_forward.1} parent=0 // pred_region
    _
  $region49: #{classifier1_forward.1} parent=0 // pred_fallthru
    _
  // Predicated region
  $region50: #{classifier1_forward.1} parent=0 // pred_check
    _
  $region51: #{classifier1_forward.1} parent=0 // pred_check_branch
    %44 = sbr.rel (0) target = $region53
  $region52: #{classifier1_forward.1} parent=0 // pred_region
    _
  $region53: #{classifier1_forward.1} parent=0 // pred_fallthru
    _
  // Predicated region
  $region54: #{classifier1_forward.1} parent=0 // pred_check
    _
  $region55: #{classifier1_forward.1} parent=0 // pred_check_branch
    %46 = sbr.rel (0) target = $region57
  $region56: #{classifier1_forward.1} parent=0 // pred_region
    _
  $region57: #{classifier1_forward.1} parent=0 // pred_fallthru
    _
  %v48 = vld [vmem:[%s0] sm:$0xff]
  %v49 = vld [vmem:[%s0 + $0x8] sm:$0xff]
  %v50 = vld [vmem:[%s0 + $0x10] sm:$0xff]
  %v51 = vld [vmem:[%s0 + $0x18] sm:$0xff]
  %v52 = vld [vmem:[%s1] sm:$0xff]
  %v53 = vld [vmem:[%s1 + $0x8] sm:$0xff]
  %v54 = vld [vmem:[%s1 + $0x10] sm:$0xff]
  %v55 = vld [vmem:[%s1 + $0x18] sm:$0xff]
  %v56 = vld [vmem:[%s1 + $0x20] sm:$0xff]
  %v57 = vld [vmem:[%s1 + $0x28] sm:$0xff]
  %v58 = vld [vmem:[%s1 + $0x30] sm:$0xff]
  %v59 = vld [vmem:[%s1 + $0x38] sm:$0xff]
  %v60 = vld [vmem:[%s1 + $0x40] sm:$0xff]
  %v61 = vld [vmem:[%s1 + $0x48] sm:$0xff]
  %v62 = vld [vmem:[%s1 + $0x50] sm:$0xff]
  %v63 = vld [vmem:[%s1 + $0x58] sm:$0xff]
  %v64 = vld [vmem:[%s1 + $0x60] sm:$0xff]
  %v65 = vld [vmem:[%s1 + $0x68] sm:$0xff]
  %v66 = vld [vmem:[%s1 + $0x70] sm:$0xff]
  %v67 = vld [vmem:[%s1 + $0x78] sm:$0xff]
  %v68 = vld [vmem:[%s1 + $0x80] sm:$0xff]
  %v69 = vld [vmem:[%s1 + $0x88] sm:$0xff]
  %v70 = vld [vmem:[%s1 + $0x90] sm:$0xff]
  %v71 = vld [vmem:[%s1 + $0x98] sm:$0xff]
  %v72 = vld [vmem:[%s1 + $0xa0] sm:$0xff]
  %v73 = vld [vmem:[%s1 + $0xa8] sm:$0xff]
  %v74 = vld [vmem:[%s1 + $0xb0] sm:$0xff]
  %v75 = vld [vmem:[%s1 + $0xb8] sm:$0xff]
  %v76 = vld [vmem:[%s1 + $0xc0] sm:$0xff]
  %v77 = vld [vmem:[%s1 + $0xc8] sm:$0xff]
  %v78 = vld [vmem:[%s1 + $0xd0] sm:$0xff]
  %v79 = vld [vmem:[%s1 + $0xd8] sm:$0xff]
  %v80 = vld [vmem:[%s1 + $0xe0] sm:$0xff]
  %v81 = vld [vmem:[%s1 + $0xe8] sm:$0xff]
  %v82 = vld [vmem:[%s1 + $0xf0] sm:$0xff]
  %v83 = vld [vmem:[%s1 + $0xf8] sm:$0xff]
  %v84 = vld [vmem:[%s1 + $0x100] sm:$0xff]
  %v85 = vld [vmem:[%s1 + $0x108] sm:$0xff]
  %v86 = vld [vmem:[%s1 + $0x110] sm:$0xff]
  %v87 = vld [vmem:[%s1 + $0x118] sm:$0xff]
  %v88 = vld [vmem:[%s1 + $0x120] sm:$0xff]
  %v89 = vld [vmem:[%s1 + $0x128] sm:$0xff]
  %v90 = vld [vmem:[%s1 + $0x130] sm:$0xff]
  %v91 = vld [vmem:[%s1 + $0x138] sm:$0xff]
  %v92 = vld [vmem:[%s1 + $0x140] sm:$0xff]
  %v93 = vld [vmem:[%s1 + $0x148] sm:$0xff]
  %v94 = vld [vmem:[%s1 + $0x150] sm:$0xff]
  %v95 = vld [vmem:[%s1 + $0x158] sm:$0xff]
  %v96 = vld [vmem:[%s1 + $0x160] sm:$0xff]
  %v97 = vld [vmem:[%s1 + $0x168] sm:$0xff]
  %v98 = vld [vmem:[%s1 + $0x170] sm:$0xff]
  %v99 = vld [vmem:[%s1 + $0x178] sm:$0xff]
  %v100 = vld [vmem:[%s1 + $0x180] sm:$0xff]
  %v101 = vld [vmem:[%s1 + $0x188] sm:$0xff]
  %v102 = vld [vmem:[%s1 + $0x190] sm:$0xff]
  %v103 = vld [vmem:[%s1 + $0x198] sm:$0xff]
  %v104 = vld [vmem:[%s1 + $0x1a0] sm:$0xff]
  %v105 = vld [vmem:[%s1 + $0x1a8] sm:$0xff]
  %v106 = vld [vmem:[%s1 + $0x1b0] sm:$0xff]
  %v107 = vld [vmem:[%s1 + $0x1b8] sm:$0xff]
  %v108 = vld [vmem:[%s1 + $0x1c0] sm:$0xff]
  %v109 = vld [vmem:[%s1 + $0x1c8] sm:$0xff]
  %v110 = vld [vmem:[%s1 + $0x1d0] sm:$0xff]
  %v111 = vld [vmem:[%s1 + $0x1d8] sm:$0xff]
  %v112 = vld [vmem:[%s1 + $0x1e0] sm:$0xff]
  %v113 = vld [vmem:[%s1 + $0x1e8] sm:$0xff]
  %v114 = vld [vmem:[%s1 + $0x1f0] sm:$0xff]
  %v115 = vld [vmem:[%s1 + $0x1f8] sm:$0xff]
  %v116 = vld [vmem:[%s1 + $0x200] sm:$0xff]
  %v117 = vld [vmem:[%s1 + $0x208] sm:$0xff]
  %v118 = vld [vmem:[%s1 + $0x210] sm:$0xff]
  %v119 = vld [vmem:[%s1 + $0x218] sm:$0xff]
  %v120 = vld [vmem:[%s1 + $0x220] sm:$0xff]
  %v121 = vld [vmem:[%s1 + $0x228] sm:$0xff]
  %v122 = vld [vmem:[%s1 + $0x230] sm:$0xff]
  %v123 = vld [vmem:[%s1 + $0x238] sm:$0xff]
  %v124 = vld [vmem:[%s1 + $0x240] sm:$0xff]
  %v125 = vld [vmem:[%s1 + $0x248] sm:$0xff]
  %v126 = vld [vmem:[%s1 + $0x250] sm:$0xff]
  %v127 = vld [vmem:[%s1 + $0x258] sm:$0xff]
  %v128 = vld [vmem:[%s1 + $0x260] sm:$0xff]
  %v129 = vld [vmem:[%s1 + $0x268] sm:$0xff]
  %v130 = vld [vmem:[%s1 + $0x270] sm:$0xff]
  %v131 = vld [vmem:[%s1 + $0x278] sm:$0xff]
  %v132 = vld [vmem:[%s1 + $0x280] sm:$0xff]
  %v133 = vld [vmem:[%s1 + $0x288] sm:$0xff]
  %v134 = vld [vmem:[%s1 + $0x290] sm:$0xff]
  %v135 = vld [vmem:[%s1 + $0x298] sm:$0xff]
  %v136 = vld [vmem:[%s1 + $0x2a0] sm:$0xff]
  %v137 = vld [vmem:[%s1 + $0x2a8] sm:$0xff]
  %v138 = vld [vmem:[%s1 + $0x2b0] sm:$0xff]
  %v139 = vld [vmem:[%s1 + $0x2b8] sm:$0xff]
  %v140 = vld [vmem:[%s1 + $0x2c0] sm:$0xff]
  %v141 = vld [vmem:[%s1 + $0x2c8] sm:$0xff]
  %v142 = vld [vmem:[%s1 + $0x2d0] sm:$0xff]
  %v143 = vld [vmem:[%s1 + $0x2d8] sm:$0xff]
  %v144 = vld [vmem:[%s1 + $0x2e0] sm:$0xff]
  %v145 = vld [vmem:[%s1 + $0x2e8] sm:$0xff]
  %v146 = vld [vmem:[%s1 + $0x2f0] sm:$0xff]
  %v147 = vld [vmem:[%s1 + $0x2f8] sm:$0xff]
  %v148 = vld [vmem:[%s1 + $0x300] sm:$0xff]
  %v149 = vld [vmem:[%s1 + $0x308] sm:$0xff]
  %v150 = vld [vmem:[%s1 + $0x310] sm:$0xff]
  %v151 = vld [vmem:[%s1 + $0x318] sm:$0xff]
  %v152 = vld [vmem:[%s1 + $0x320] sm:$0xff]
  %v153 = vld [vmem:[%s1 + $0x328] sm:$0xff]
  %v154 = vld [vmem:[%s1 + $0x330] sm:$0xff]
  %v155 = vld [vmem:[%s1 + $0x338] sm:$0xff]
  %v156 = vld [vmem:[%s1 + $0x340] sm:$0xff]
  %v157 = vld [vmem:[%s1 + $0x348] sm:$0xff]
  %v158 = vld [vmem:[%s1 + $0x350] sm:$0xff]
  %v159 = vld [vmem:[%s1 + $0x358] sm:$0xff]
  %v160 = vld [vmem:[%s1 + $0x360] sm:$0xff]
  %v161 = vld [vmem:[%s1 + $0x368] sm:$0xff]
  %v162 = vld [vmem:[%s1 + $0x370] sm:$0xff]
  %v163 = vld [vmem:[%s1 + $0x378] sm:$0xff]
  %v164 = vld [vmem:[%s1 + $0x380] sm:$0xff]
  %v165 = vld [vmem:[%s1 + $0x388] sm:$0xff]
  %v166 = vld [vmem:[%s1 + $0x390] sm:$0xff]
  %v167 = vld [vmem:[%s1 + $0x398] sm:$0xff]
  %v168 = vld [vmem:[%s1 + $0x3a0] sm:$0xff]
  %v169 = vld [vmem:[%s1 + $0x3a8] sm:$0xff]
  %v170 = vld [vmem:[%s1 + $0x3b0] sm:$0xff]
  %v171 = vld [vmem:[%s1 + $0x3b8] sm:$0xff]
  %v172 = vld [vmem:[%s1 + $0x3c0] sm:$0xff]
  %v173 = vld [vmem:[%s1 + $0x3c8] sm:$0xff]
  %v174 = vld [vmem:[%s1 + $0x3d0] sm:$0xff]
  %v175 = vld [vmem:[%s1 + $0x3d8] sm:$0xff]
  %v176 = vld [vmem:[%s1 + $0x3e0] sm:$0xff]
  %v177 = vld [vmem:[%s1 + $0x3e8] sm:$0xff]
  %v178 = vld [vmem:[%s1 + $0x3f0] sm:$0xff]
  %v179 = vld [vmem:[%s1 + $0x3f8] sm:$0xff]
  %v184 = vunpack.c.l.b16 %v48
  %v185 = vunpack.c.h.b16 %v48
  %v186 = vunpack.c.l.b16 %v49
  %v187 = vunpack.c.h.b16 %v49
  %v188 = vunpack.c.l.b16 %v50
  %v189 = vunpack.c.h.b16 %v50
  %v190 = vunpack.c.l.b16 %v51
  %v191 = vunpack.c.h.b16 %v51
  %v192 = vpack.c.b16 %v184, %v184
  %v193 = vpack.c.b16 %v185, %v185
  %v194 = vpack.c.b16 %v186, %v186
  %v195 = vpack.c.b16 %v187, %v187
  %v196 = vpack.c.b16 %v188, %v188
  %v197 = vpack.c.b16 %v189, %v189
  %v198 = vpack.c.b16 %v190, %v190
  %v199 = vpack.c.b16 %v191, %v191
  %v336 = vunpack.c.l.b16 %v52
  %v337 = vunpack.c.h.b16 %v52
  %v338 = vunpack.c.l.b16 %v53
  %v339 = vunpack.c.h.b16 %v53
  %v340 = vunpack.c.l.b16 %v54
  %v341 = vunpack.c.h.b16 %v54
  %v342 = vunpack.c.l.b16 %v55
  %v343 = vunpack.c.h.b16 %v55
  %v344 = vunpack.c.l.b16 %v56
  %v345 = vunpack.c.h.b16 %v56
  %v346 = vunpack.c.l.b16 %v57
  %v347 = vunpack.c.h.b16 %v57
  %v348 = vunpack.c.l.b16 %v58
  %v349 = vunpack.c.h.b16 %v58
  %v350 = vunpack.c.l.b16 %v59
  %v351 = vunpack.c.h.b16 %v59
  %v352 = vunpack.c.l.b16 %v60
  %v353 = vunpack.c.h.b16 %v60
  %v354 = vunpack.c.l.b16 %v61
  %v355 = vunpack.c.h.b16 %v61
  %v356 = vunpack.c.l.b16 %v62
  %v357 = vunpack.c.h.b16 %v62
  %v358 = vunpack.c.l.b16 %v63
  %v359 = vunpack.c.h.b16 %v63
  %v360 = vunpack.c.l.b16 %v64
  %v361 = vunpack.c.h.b16 %v64
  %v362 = vunpack.c.l.b16 %v65
  %v363 = vunpack.c.h.b16 %v65
  %v364 = vunpack.c.l.b16 %v66
  %v365 = vunpack.c.h.b16 %v66
  %v366 = vunpack.c.l.b16 %v67
  %v367 = vunpack.c.h.b16 %v67
  %v368 = vunpack.c.l.b16 %v68
  %v369 = vunpack.c.h.b16 %v68
  %v370 = vunpack.c.l.b16 %v69
  %v371 = vunpack.c.h.b16 %v69
  %v372 = vunpack.c.l.b16 %v70
  %v373 = vunpack.c.h.b16 %v70
  %v374 = vunpack.c.l.b16 %v71
  %v375 = vunpack.c.h.b16 %v71
  %v376 = vunpack.c.l.b16 %v72
  %v377 = vunpack.c.h.b16 %v72
  %v378 = vunpack.c.l.b16 %v73
  %v379 = vunpack.c.h.b16 %v73
  %v380 = vunpack.c.l.b16 %v74
  %v381 = vunpack.c.h.b16 %v74
  %v382 = vunpack.c.l.b16 %v75
  %v383 = vunpack.c.h.b16 %v75
  %v384 = vunpack.c.l.b16 %v76
  %v385 = vunpack.c.h.b16 %v76
  %v386 = vunpack.c.l.b16 %v77
  %v387 = vunpack.c.h.b16 %v77
  %v388 = vunpack.c.l.b16 %v78
  %v389 = vunpack.c.h.b16 %v78
  %v390 = vunpack.c.l.b16 %v79
  %v391 = vunpack.c.h.b16 %v79
  %v392 = vunpack.c.l.b16 %v80
  %v393 = vunpack.c.h.b16 %v80
  %v394 = vunpack.c.l.b16 %v81
  %v395 = vunpack.c.h.b16 %v81
  %v396 = vunpack.c.l.b16 %v82
  %v397 = vunpack.c.h.b16 %v82
  %v398 = vunpack.c.l.b16 %v83
  %v399 = vunpack.c.h.b16 %v83
  %v400 = vunpack.c.l.b16 %v84
  %v401 = vunpack.c.h.b16 %v84
  %v402 = vunpack.c.l.b16 %v85
  %v403 = vunpack.c.h.b16 %v85
  %v404 = vunpack.c.l.b16 %v86
  %v405 = vunpack.c.h.b16 %v86
  %v406 = vunpack.c.l.b16 %v87
  %v407 = vunpack.c.h.b16 %v87
  %v408 = vunpack.c.l.b16 %v88
  %v409 = vunpack.c.h.b16 %v88
  %v410 = vunpack.c.l.b16 %v89
  %v411 = vunpack.c.h.b16 %v89
  %v412 = vunpack.c.l.b16 %v90
  %v413 = vunpack.c.h.b16 %v90
  %v414 = vunpack.c.l.b16 %v91
  %v415 = vunpack.c.h.b16 %v91
  %v416 = vunpack.c.l.b16 %v92
  %v417 = vunpack.c.h.b16 %v92
  %v418 = vunpack.c.l.b16 %v93
  %v419 = vunpack.c.h.b16 %v93
  %v420 = vunpack.c.l.b16 %v94
  %v421 = vunpack.c.h.b16 %v94
  %v422 = vunpack.c.l.b16 %v95
  %v423 = vunpack.c.h.b16 %v95
  %v424 = vunpack.c.l.b16 %v96
  %v425 = vunpack.c.h.b16 %v96
  %v426 = vunpack.c.l.b16 %v97
  %v427 = vunpack.c.h.b16 %v97
  %v428 = vunpack.c.l.b16 %v98
  %v429 = vunpack.c.h.b16 %v98
  %v430 = vunpack.c.l.b16 %v99
  %v431 = vunpack.c.h.b16 %v99
  %v432 = vunpack.c.l.b16 %v100
  %v433 = vunpack.c.h.b16 %v100
  %v434 = vunpack.c.l.b16 %v101
  %v435 = vunpack.c.h.b16 %v101
  %v436 = vunpack.c.l.b16 %v102
  %v437 = vunpack.c.h.b16 %v102
  %v438 = vunpack.c.l.b16 %v103
  %v439 = vunpack.c.h.b16 %v103
  %v440 = vunpack.c.l.b16 %v104
  %v441 = vunpack.c.h.b16 %v104
  %v442 = vunpack.c.l.b16 %v105
  %v443 = vunpack.c.h.b16 %v105
  %v444 = vunpack.c.l.b16 %v106
  %v445 = vunpack.c.h.b16 %v106
  %v446 = vunpack.c.l.b16 %v107
  %v447 = vunpack.c.h.b16 %v107
  %v448 = vunpack.c.l.b16 %v108
  %v449 = vunpack.c.h.b16 %v108
  %v450 = vunpack.c.l.b16 %v109
  %v451 = vunpack.c.h.b16 %v109
  %v452 = vunpack.c.l.b16 %v110
  %v453 = vunpack.c.h.b16 %v110
  %v454 = vunpack.c.l.b16 %v111
  %v455 = vunpack.c.h.b16 %v111
  %v456 = vunpack.c.l.b16 %v112
  %v457 = vunpack.c.h.b16 %v112
  %v458 = vunpack.c.l.b16 %v113
  %v459 = vunpack.c.h.b16 %v113
  %v460 = vunpack.c.l.b16 %v114
  %v461 = vunpack.c.h.b16 %v114
  %v462 = vunpack.c.l.b16 %v115
  %v463 = vunpack.c.h.b16 %v115
  %v464 = vunpack.c.l.b16 %v116
  %v465 = vunpack.c.h.b16 %v116
  %v466 = vunpack.c.l.b16 %v117
  %v467 = vunpack.c.h.b16 %v117
  %v468 = vunpack.c.l.b16 %v118
  %v469 = vunpack.c.h.b16 %v118
  %v470 = vunpack.c.l.b16 %v119
  %v471 = vunpack.c.h.b16 %v119
  %v472 = vunpack.c.l.b16 %v120
  %v473 = vunpack.c.h.b16 %v120
  %v474 = vunpack.c.l.b16 %v121
  %v475 = vunpack.c.h.b16 %v121
  %v476 = vunpack.c.l.b16 %v122
  %v477 = vunpack.c.h.b16 %v122
  %v478 = vunpack.c.l.b16 %v123
  %v479 = vunpack.c.h.b16 %v123
  %v480 = vunpack.c.l.b16 %v124
  %v481 = vunpack.c.h.b16 %v124
  %v482 = vunpack.c.l.b16 %v125
  %v483 = vunpack.c.h.b16 %v125
  %v484 = vunpack.c.l.b16 %v126
  %v485 = vunpack.c.h.b16 %v126
  %v486 = vunpack.c.l.b16 %v127
  %v487 = vunpack.c.h.b16 %v127
  %v488 = vunpack.c.l.b16 %v128
  %v489 = vunpack.c.h.b16 %v128
  %v490 = vunpack.c.l.b16 %v129
  %v491 = vunpack.c.h.b16 %v129
  %v492 = vunpack.c.l.b16 %v130
  %v493 = vunpack.c.h.b16 %v130
  %v494 = vunpack.c.l.b16 %v131
  %v495 = vunpack.c.h.b16 %v131
  %v496 = vunpack.c.l.b16 %v132
  %v497 = vunpack.c.h.b16 %v132
  %v498 = vunpack.c.l.b16 %v133
  %v499 = vunpack.c.h.b16 %v133
  %v500 = vunpack.c.l.b16 %v134
  %v501 = vunpack.c.h.b16 %v134
  %v502 = vunpack.c.l.b16 %v135
  %v503 = vunpack.c.h.b16 %v135
  %v504 = vunpack.c.l.b16 %v136
  %v505 = vunpack.c.h.b16 %v136
  %v506 = vunpack.c.l.b16 %v137
  %v507 = vunpack.c.h.b16 %v137
  %v508 = vunpack.c.l.b16 %v138
  %v509 = vunpack.c.h.b16 %v138
  %v510 = vunpack.c.l.b16 %v139
  %v511 = vunpack.c.h.b16 %v139
  %v512 = vunpack.c.l.b16 %v140
  %v513 = vunpack.c.h.b16 %v140
  %v514 = vunpack.c.l.b16 %v141
  %v515 = vunpack.c.h.b16 %v141
  %v516 = vunpack.c.l.b16 %v142
  %v517 = vunpack.c.h.b16 %v142
  %v518 = vunpack.c.l.b16 %v143
  %v519 = vunpack.c.h.b16 %v143
  %v520 = vunpack.c.l.b16 %v144
  %v521 = vunpack.c.h.b16 %v144
  %v522 = vunpack.c.l.b16 %v145
  %v523 = vunpack.c.h.b16 %v145
  %v524 = vunpack.c.l.b16 %v146
  %v525 = vunpack.c.h.b16 %v146
  %v526 = vunpack.c.l.b16 %v147
  %v527 = vunpack.c.h.b16 %v147
  %v528 = vunpack.c.l.b16 %v148
  %v529 = vunpack.c.h.b16 %v148
  %v530 = vunpack.c.l.b16 %v149
  %v531 = vunpack.c.h.b16 %v149
  %v532 = vunpack.c.l.b16 %v150
  %v533 = vunpack.c.h.b16 %v150
  %v534 = vunpack.c.l.b16 %v151
  %v535 = vunpack.c.h.b16 %v151
  %v536 = vunpack.c.l.b16 %v152
  %v537 = vunpack.c.h.b16 %v152
  %v538 = vunpack.c.l.b16 %v153
  %v539 = vunpack.c.h.b16 %v153
  %v540 = vunpack.c.l.b16 %v154
  %v541 = vunpack.c.h.b16 %v154
  %v542 = vunpack.c.l.b16 %v155
  %v543 = vunpack.c.h.b16 %v155
  %v544 = vunpack.c.l.b16 %v156
  %v545 = vunpack.c.h.b16 %v156
  %v546 = vunpack.c.l.b16 %v157
  %v547 = vunpack.c.h.b16 %v157
  %v548 = vunpack.c.l.b16 %v158
  %v549 = vunpack.c.h.b16 %v158
  %v550 = vunpack.c.l.b16 %v159
  %v551 = vunpack.c.h.b16 %v159
  %v552 = vunpack.c.l.b16 %v160
  %v553 = vunpack.c.h.b16 %v160
  %v554 = vunpack.c.l.b16 %v161
  %v555 = vunpack.c.h.b16 %v161
  %v556 = vunpack.c.l.b16 %v162
  %v557 = vunpack.c.h.b16 %v162
  %v558 = vunpack.c.l.b16 %v163
  %v559 = vunpack.c.h.b16 %v163
  %v560 = vunpack.c.l.b16 %v164
  %v561 = vunpack.c.h.b16 %v164
  %v562 = vunpack.c.l.b16 %v165
  %v563 = vunpack.c.h.b16 %v165
  %v564 = vunpack.c.l.b16 %v166
  %v565 = vunpack.c.h.b16 %v166
  %v566 = vunpack.c.l.b16 %v167
  %v567 = vunpack.c.h.b16 %v167
  %v568 = vunpack.c.l.b16 %v168
  %v569 = vunpack.c.h.b16 %v168
  %v570 = vunpack.c.l.b16 %v169
  %v571 = vunpack.c.h.b16 %v169
  %v572 = vunpack.c.l.b16 %v170
  %v573 = vunpack.c.h.b16 %v170
  %v574 = vunpack.c.l.b16 %v171
  %v575 = vunpack.c.h.b16 %v171
  %v576 = vunpack.c.l.b16 %v172
  %v577 = vunpack.c.h.b16 %v172
  %v578 = vunpack.c.l.b16 %v173
  %v579 = vunpack.c.h.b16 %v173
  %v580 = vunpack.c.l.b16 %v174
  %v581 = vunpack.c.h.b16 %v174
  %v582 = vunpack.c.l.b16 %v175
  %v583 = vunpack.c.h.b16 %v175
  %v584 = vunpack.c.l.b16 %v176
  %v585 = vunpack.c.h.b16 %v176
  %v586 = vunpack.c.l.b16 %v177
  %v587 = vunpack.c.h.b16 %v177
  %v588 = vunpack.c.l.b16 %v178
  %v589 = vunpack.c.h.b16 %v178
  %v590 = vunpack.c.l.b16 %v179
  %v591 = vunpack.c.h.b16 %v179
  %v592 = vpack.c.b16 %v338, %v336
  %v593 = vpack.c.b16 %v339, %v337
  %v594 = vpack.c.b16 %v342, %v340
  %v595 = vpack.c.b16 %v343, %v341
  %v596 = vpack.c.b16 %v346, %v344
  %v597 = vpack.c.b16 %v347, %v345
  %v598 = vpack.c.b16 %v350, %v348
  %v599 = vpack.c.b16 %v351, %v349
  %v600 = vpack.c.b16 %v354, %v352
  %v601 = vpack.c.b16 %v355, %v353
  %v602 = vpack.c.b16 %v358, %v356
  %v603 = vpack.c.b16 %v359, %v357
  %v604 = vpack.c.b16 %v362, %v360
  %v605 = vpack.c.b16 %v363, %v361
  %v606 = vpack.c.b16 %v366, %v364
  %v607 = vpack.c.b16 %v367, %v365
  %v608 = vpack.c.b16 %v370, %v368
  %v609 = vpack.c.b16 %v371, %v369
  %v610 = vpack.c.b16 %v374, %v372
  %v611 = vpack.c.b16 %v375, %v373
  %v612 = vpack.c.b16 %v378, %v376
  %v613 = vpack.c.b16 %v379, %v377
  %v614 = vpack.c.b16 %v382, %v380
  %v615 = vpack.c.b16 %v383, %v381
  %v616 = vpack.c.b16 %v386, %v384
  %v617 = vpack.c.b16 %v387, %v385
  %v618 = vpack.c.b16 %v390, %v388
  %v619 = vpack.c.b16 %v391, %v389
  %v620 = vpack.c.b16 %v394, %v392
  %v621 = vpack.c.b16 %v395, %v393
  %v622 = vpack.c.b16 %v398, %v396
  %v623 = vpack.c.b16 %v399, %v397
  %v624 = vpack.c.b16 %v402, %v400
  %v625 = vpack.c.b16 %v403, %v401
  %v626 = vpack.c.b16 %v406, %v404
  %v627 = vpack.c.b16 %v407, %v405
  %v628 = vpack.c.b16 %v410, %v408
  %v629 = vpack.c.b16 %v411, %v409
  %v630 = vpack.c.b16 %v414, %v412
  %v631 = vpack.c.b16 %v415, %v413
  %v632 = vpack.c.b16 %v418, %v416
  %v633 = vpack.c.b16 %v419, %v417
  %v634 = vpack.c.b16 %v422, %v420
  %v635 = vpack.c.b16 %v423, %v421
  %v636 = vpack.c.b16 %v426, %v424
  %v637 = vpack.c.b16 %v427, %v425
  %v638 = vpack.c.b16 %v430, %v428
  %v639 = vpack.c.b16 %v431, %v429
  %v640 = vpack.c.b16 %v434, %v432
  %v641 = vpack.c.b16 %v435, %v433
  %v642 = vpack.c.b16 %v438, %v436
  %v643 = vpack.c.b16 %v439, %v437
  %v644 = vpack.c.b16 %v442, %v440
  %v645 = vpack.c.b16 %v443, %v441
  %v646 = vpack.c.b16 %v446, %v444
  %v647 = vpack.c.b16 %v447, %v445
  %v648 = vpack.c.b16 %v450, %v448
  %v649 = vpack.c.b16 %v451, %v449
  %v650 = vpack.c.b16 %v454, %v452
  %v651 = vpack.c.b16 %v455, %v453
  %v652 = vpack.c.b16 %v458, %v456
  %v653 = vpack.c.b16 %v459, %v457
  %v654 = vpack.c.b16 %v462, %v460
  %v655 = vpack.c.b16 %v463, %v461
  %v656 = vpack.c.b16 %v466, %v464
  %v657 = vpack.c.b16 %v467, %v465
  %v658 = vpack.c.b16 %v470, %v468
  %v659 = vpack.c.b16 %v471, %v469
  %v660 = vpack.c.b16 %v474, %v472
  %v661 = vpack.c.b16 %v475, %v473
  %v662 = vpack.c.b16 %v478, %v476
  %v663 = vpack.c.b16 %v479, %v477
  %v664 = vpack.c.b16 %v482, %v480
  %v665 = vpack.c.b16 %v483, %v481
  %v666 = vpack.c.b16 %v486, %v484
  %v667 = vpack.c.b16 %v487, %v485
  %v668 = vpack.c.b16 %v490, %v488
  %v669 = vpack.c.b16 %v491, %v489
  %v670 = vpack.c.b16 %v494, %v492
  %v671 = vpack.c.b16 %v495, %v493
  %v672 = vpack.c.b16 %v498, %v496
  %v673 = vpack.c.b16 %v499, %v497
  %v674 = vpack.c.b16 %v502, %v500
  %v675 = vpack.c.b16 %v503, %v501
  %v676 = vpack.c.b16 %v506, %v504
  %v677 = vpack.c.b16 %v507, %v505
  %v678 = vpack.c.b16 %v510, %v508
  %v679 = vpack.c.b16 %v511, %v509
  %v680 = vpack.c.b16 %v514, %v512
  %v681 = vpack.c.b16 %v515, %v513
  %v682 = vpack.c.b16 %v518, %v516
  %v683 = vpack.c.b16 %v519, %v517
  %v684 = vpack.c.b16 %v522, %v520
  %v685 = vpack.c.b16 %v523, %v521
  %v686 = vpack.c.b16 %v526, %v524
  %v687 = vpack.c.b16 %v527, %v525
  %v688 = vpack.c.b16 %v530, %v528
  %v689 = vpack.c.b16 %v531, %v529
  %v690 = vpack.c.b16 %v534, %v532
  %v691 = vpack.c.b16 %v535, %v533
  %v692 = vpack.c.b16 %v538, %v536
  %v693 = vpack.c.b16 %v539, %v537
  %v694 = vpack.c.b16 %v542, %v540
  %v695 = vpack.c.b16 %v543, %v541
  %v696 = vpack.c.b16 %v546, %v544
  %v697 = vpack.c.b16 %v547, %v545
  %v698 = vpack.c.b16 %v550, %v548
  %v699 = vpack.c.b16 %v551, %v549
  %v700 = vpack.c.b16 %v554, %v552
  %v701 = vpack.c.b16 %v555, %v553
  %v702 = vpack.c.b16 %v558, %v556
  %v703 = vpack.c.b16 %v559, %v557
  %v704 = vpack.c.b16 %v562, %v560
  %v705 = vpack.c.b16 %v563, %v561
  %v706 = vpack.c.b16 %v566, %v564
  %v707 = vpack.c.b16 %v567, %v565
  %v708 = vpack.c.b16 %v570, %v568
  %v709 = vpack.c.b16 %v571, %v569
  %v710 = vpack.c.b16 %v574, %v572
  %v711 = vpack.c.b16 %v575, %v573
  %v712 = vpack.c.b16 %v578, %v576
  %v713 = vpack.c.b16 %v579, %v577
  %v714 = vpack.c.b16 %v582, %v580
  %v715 = vpack.c.b16 %v583, %v581
  %v716 = vpack.c.b16 %v586, %v584
  %v717 = vpack.c.b16 %v587, %v585
  %v718 = vpack.c.b16 %v590, %v588
  %v719 = vpack.c.b16 %v591, %v589
  %848 = vmatprep.subr.bf16.mxu0 %v593
  %849 = vmatpush1.bf16.msra.mxu0 %v592
  %850 = vmatprep.subr.bf16.mxu0 %v595
  %851 = vmatpush1.bf16.msra.mxu0 %v594
  %852 = vmatprep.subr.bf16.mxu0 %v597
  %853 = vmatpush1.bf16.msra.mxu0 %v596
  %854 = vmatprep.subr.bf16.mxu0 %v599
  %855 = vmatpush1.bf16.msra.mxu0 %v598
  %856 = vmatprep.subr.bf16.mxu0 %v601
  %857 = vmatpush1.bf16.msra.mxu0 %v600
  %858 = vmatprep.subr.bf16.mxu0 %v603
  %859 = vmatpush1.bf16.msra.mxu0 %v602
  %860 = vmatprep.subr.bf16.mxu0 %v605
  %861 = vmatpush1.bf16.msra.mxu0 %v604
  %862 = vmatprep.subr.bf16.mxu0 %v607
  %863 = vmatpush1.bf16.msra.mxu0 %v606
  %864 = vmatprep.subr.bf16.mxu0 %v609
  %865 = vmatpush1.bf16.msra.mxu0 %v608
  %866 = vmatprep.subr.bf16.mxu0 %v611
  %867 = vmatpush1.bf16.msra.mxu0 %v610
  %868 = vmatprep.subr.bf16.mxu0 %v613
  %869 = vmatpush1.bf16.msra.mxu0 %v612
  %870 = vmatprep.subr.bf16.mxu0 %v615
  %871 = vmatpush1.bf16.msra.mxu0 %v614
  %872 = vmatprep.subr.bf16.mxu0 %v617
  %873 = vmatpush1.bf16.msra.mxu0 %v616
  %874 = vmatprep.subr.bf16.mxu0 %v619
  %875 = vmatpush1.bf16.msra.mxu0 %v618
  %876 = vmatprep.subr.bf16.mxu0 %v621
  %877 = vmatpush1.bf16.msra.mxu0 %v620
  %878 = vmatprep.subr.bf16.mxu0 %v623
  %879 = vmatpush1.bf16.msra.mxu0 %v622
  %880 = vmatprep.mubr.bf16.mxu0 %v193
  %881 = vmatmul.mubr.bf16.gmra.mrb[0].mxu0 %v192
  %v882 = vpop.f32.mrb[0].mxu0
  %v883 = vadd.f32 0.0, %v882
  %v884 = vpop.f32.mrb[0].mxu0
  %v885 = vadd.f32 0.0, %v884
  %v886 = vpop.f32.mrb[0].mxu0
  %v887 = vpop.f32.mrb[0].mxu0
  %888 = vdwg.mxu0
  %889 = vmatprep.subr.bf16.mxu0 %v625
  %890 = vmatpush1.bf16.msra.mxu0 %v624
  %891 = vmatprep.subr.bf16.mxu0 %v627
  %892 = vmatpush1.bf16.msra.mxu0 %v626
  %893 = vmatprep.subr.bf16.mxu0 %v629
  %894 = vmatpush1.bf16.msra.mxu0 %v628
  %895 = vmatprep.subr.bf16.mxu0 %v631
  %896 = vmatpush1.bf16.msra.mxu0 %v630
  %897 = vmatprep.subr.bf16.mxu0 %v633
  %898 = vmatpush1.bf16.msra.mxu0 %v632
  %899 = vmatprep.subr.bf16.mxu0 %v635
  %900 = vmatpush1.bf16.msra.mxu0 %v634
  %901 = vmatprep.subr.bf16.mxu0 %v637
  %902 = vmatpush1.bf16.msra.mxu0 %v636
  %903 = vmatprep.subr.bf16.mxu0 %v639
  %904 = vmatpush1.bf16.msra.mxu0 %v638
  %905 = vmatprep.subr.bf16.mxu0 %v641
  %906 = vmatpush1.bf16.msra.mxu0 %v640
  %907 = vmatprep.subr.bf16.mxu0 %v643
  %908 = vmatpush1.bf16.msra.mxu0 %v642
  %909 = vmatprep.subr.bf16.mxu0 %v645
  %910 = vmatpush1.bf16.msra.mxu0 %v644
  %911 = vmatprep.subr.bf16.mxu0 %v647
  %912 = vmatpush1.bf16.msra.mxu0 %v646
  %913 = vmatprep.subr.bf16.mxu0 %v649
  %914 = vmatpush1.bf16.msra.mxu0 %v648
  %915 = vmatprep.subr.bf16.mxu0 %v651
  %916 = vmatpush1.bf16.msra.mxu0 %v650
  %917 = vmatprep.subr.bf16.mxu0 %v653
  %918 = vmatpush1.bf16.msra.mxu0 %v652
  %919 = vmatprep.subr.bf16.mxu0 %v655
  %920 = vmatpush1.bf16.msra.mxu0 %v654
  %921 = vmatprep.mubr.bf16.mxu0 %v195
  %922 = vmatmul.mubr.bf16.gmra.mrb[0].mxu0 %v194
  %v923 = vpop.f32.mrb[0].mxu0
  %v924 = vadd.f32 %v883, %v923
  %v925 = vpop.f32.mrb[0].mxu0
  %v926 = vadd.f32 %v885, %v925
  %v927 = vpop.f32.mrb[0].mxu0
  %v928 = vpop.f32.mrb[0].mxu0
  %929 = vdwg.mxu0
  %930 = vmatprep.subr.bf16.mxu0 %v657
  %931 = vmatpush1.bf16.msra.mxu0 %v656
  %932 = vmatprep.subr.bf16.mxu0 %v659
  %933 = vmatpush1.bf16.msra.mxu0 %v658
  %934 = vmatprep.subr.bf16.mxu0 %v661
  %935 = vmatpush1.bf16.msra.mxu0 %v660
  %936 = vmatprep.subr.bf16.mxu0 %v663
  %937 = vmatpush1.bf16.msra.mxu0 %v662
  %938 = vmatprep.subr.bf16.mxu0 %v665
  %939 = vmatpush1.bf16.msra.mxu0 %v664
  %940 = vmatprep.subr.bf16.mxu0 %v667
  %941 = vmatpush1.bf16.msra.mxu0 %v666
  %942 = vmatprep.subr.bf16.mxu0 %v669
  %943 = vmatpush1.bf16.msra.mxu0 %v668
  %944 = vmatprep.subr.bf16.mxu0 %v671
  %945 = vmatpush1.bf16.msra.mxu0 %v670
  %946 = vmatprep.subr.bf16.mxu0 %v673
  %947 = vmatpush1.bf16.msra.mxu0 %v672
  %948 = vmatprep.subr.bf16.mxu0 %v675
  %949 = vmatpush1.bf16.msra.mxu0 %v674
  %950 = vmatprep.subr.bf16.mxu0 %v677
  %951 = vmatpush1.bf16.msra.mxu0 %v676
  %952 = vmatprep.subr.bf16.mxu0 %v679
  %953 = vmatpush1.bf16.msra.mxu0 %v678
  %954 = vmatprep.subr.bf16.mxu0 %v681
  %955 = vmatpush1.bf16.msra.mxu0 %v680
  %956 = vmatprep.subr.bf16.mxu0 %v683
  %957 = vmatpush1.bf16.msra.mxu0 %v682
  %958 = vmatprep.subr.bf16.mxu0 %v685
  %959 = vmatpush1.bf16.msra.mxu0 %v684
  %960 = vmatprep.subr.bf16.mxu0 %v687
  %961 = vmatpush1.bf16.msra.mxu0 %v686
  %962 = vmatprep.mubr.bf16.mxu0 %v197
  %963 = vmatmul.mubr.bf16.gmra.mrb[0].mxu0 %v196
  %v964 = vpop.f32.mrb[0].mxu0
  %v965 = vadd.f32 %v924, %v964
  %v966 = vpop.f32.mrb[0].mxu0
  %v967 = vadd.f32 %v926, %v966
  %v968 = vpop.f32.mrb[0].mxu0
  %v969 = vpop.f32.mrb[0].mxu0
  %970 = vdwg.mxu0
  %971 = vmatprep.subr.bf16.mxu0 %v689
  %972 = vmatpush1.bf16.msra.mxu0 %v688
  %973 = vmatprep.subr.bf16.mxu0 %v691
  %974 = vmatpush1.bf16.msra.mxu0 %v690
  %975 = vmatprep.subr.bf16.mxu0 %v693
  %976 = vmatpush1.bf16.msra.mxu0 %v692
  %977 = vmatprep.subr.bf16.mxu0 %v695
  %978 = vmatpush1.bf16.msra.mxu0 %v694
  %979 = vmatprep.subr.bf16.mxu0 %v697
  %980 = vmatpush1.bf16.msra.mxu0 %v696
  %981 = vmatprep.subr.bf16.mxu0 %v699
  %982 = vmatpush1.bf16.msra.mxu0 %v698
  %983 = vmatprep.subr.bf16.mxu0 %v701
  %984 = vmatpush1.bf16.msra.mxu0 %v700
  %985 = vmatprep.subr.bf16.mxu0 %v703
  %986 = vmatpush1.bf16.msra.mxu0 %v702
  %987 = vmatprep.subr.bf16.mxu0 %v705
  %988 = vmatpush1.bf16.msra.mxu0 %v704
  %989 = vmatprep.subr.bf16.mxu0 %v707
  %990 = vmatpush1.bf16.msra.mxu0 %v706
  %991 = vmatprep.subr.bf16.mxu0 %v709
  %992 = vmatpush1.bf16.msra.mxu0 %v708
  %993 = vmatprep.subr.bf16.mxu0 %v711
  %994 = vmatpush1.bf16.msra.mxu0 %v710
  %995 = vmatprep.subr.bf16.mxu0 %v713
  %996 = vmatpush1.bf16.msra.mxu0 %v712
  %997 = vmatprep.subr.bf16.mxu0 %v715
  %998 = vmatpush1.bf16.msra.mxu0 %v714
  %999 = vmatprep.subr.bf16.mxu0 %v717
  %1000 = vmatpush1.bf16.msra.mxu0 %v716
  %1001 = vmatprep.subr.bf16.mxu0 %v719
  %1002 = vmatpush1.bf16.msra.mxu0 %v718
  %1003 = vmatprep.mubr.bf16.mxu0 %v199
  %1004 = vmatmul.mubr.bf16.gmra.mrb[0].mxu0 %v198
  %v1005 = vpop.f32.mrb[0].mxu0
  %v1006 = vadd.f32 %v965, %v1005
  %v1007 = vpop.f32.mrb[0].mxu0
  %v1008 = vadd.f32 %v967, %v1007
  %v1009 = vpop.f32.mrb[0].mxu0
  %v1010 = vpop.f32.mrb[0].mxu0
  %1011 = vdwg.mxu0
  %v1012 = vld [vmem:[%s2] sm:$0xf]
  %v1013 = vld [vmem:[%s2 + $0x4] sm:$0xf]
  %v1014 = vld [vmem:[%s2 + $0x8] sm:$0xf]
  %v1015 = vld [vmem:[%s2 + $0xc] sm:$0xf]
  %v1016 = vpack.c.bf16 %v1006, %v1006
  %v1017 = vpack.c.bf16 %v1008, %v1008
  %v1018 = vld [vmem:[%s3] sm:$0xff]
  %v1019 = vld [vmem:[%s3 + $0x8] sm:$0xff]
  %v1020 = vld [vmem:[%s3 + $0x10] sm:$0xff]
  %v1021 = vld [vmem:[%s3 + $0x18] sm:$0xff]
  %1023 = vset.pattern.permute.xlu0 0
  %1024 = vperm.xlu0 %1023, %v1018
  %v1025 = vpop.permute.xlu0 %1024
  %1028 = vset.pattern.permute.xlu0 0
  %1029 = vperm.xlu0 %1028, %v1019
  %v1030 = vpop.permute.xlu0 %1029
  %1033 = vset.pattern.permute.xlu0 0
  %1034 = vperm.xlu0 %1033, %v1020
  %v1035 = vpop.permute.xlu0 %1034
  %1038 = vset.pattern.permute.xlu0 0
  %1039 = vperm.xlu0 %1038, %v1021
  %v1040 = vpop.permute.xlu0 %1039
  %v1046 = vunpack.c.l.b16 %v1012
  %v1047 = vunpack.c.l.b16 %v1013
  %v1048 = vunpack.c.l.b16 %v1014
  %v1049 = vunpack.c.l.b16 %v1015
  %v1050 = vpack.c.b16 %v1047, %v1046
  %v1051 = vpack.c.b16 %v1049, %v1048
  %vm1052 = vcmask 64512
  %v1054 = vsel %vm1052, %v1050, 0
  %v1057 = vsel %vm1052, %v1051, 0
  %vm1059 = vcmask 1043456
  %v1061 = vsel %vm1059, %v1016, 0
  %v1064 = vsel %vm1059, %v1017, 0
  %1066 = vmatprep.subr.bf16.mxu0 %v1064
  %1067 = vmatpush1.bf16.msra.mxu0 %v1061
  %1068 = vmatprep.subr.bf16.mxu0 0
  %1069 = vmatpush1.bf16.msra.mxu0 0
  %1070 = vmatprep.subr.bf16.mxu0 0
  %1071 = vmatpush1.bf16.msra.mxu0 0
  %1072 = vmatprep.subr.bf16.mxu0 0
  %1073 = vmatpush1.bf16.msra.mxu0 0
  %1074 = vmatprep.subr.bf16.mxu0 0
  %1075 = vmatpush1.bf16.msra.mxu0 0
  %1076 = vmatprep.subr.bf16.mxu0 0
  %1077 = vmatpush1.bf16.msra.mxu0 0
  %1078 = vmatprep.subr.bf16.mxu0 0
  %1079 = vmatpush1.bf16.msra.mxu0 0
  %1080 = vmatprep.subr.bf16.mxu0 0
  %1081 = vmatpush1.bf16.msra.mxu0 0
  %1082 = vmatprep.subr.bf16.mxu0 0
  %1083 = vmatpush1.bf16.msra.mxu0 0
  %1084 = vmatprep.subr.bf16.mxu0 0
  %1085 = vmatpush1.bf16.msra.mxu0 0
  %1086 = vmatprep.subr.bf16.mxu0 0
  %1087 = vmatpush1.bf16.msra.mxu0 0
  %1088 = vmatprep.subr.bf16.mxu0 0
  %1089 = vmatpush1.bf16.msra.mxu0 0
  %1090 = vmatprep.subr.bf16.mxu0 0
  %1091 = vmatpush1.bf16.msra.mxu0 0
  %1092 = vmatprep.subr.bf16.mxu0 0
  %1093 = vmatpush1.bf16.msra.mxu0 0
  %1094 = vmatprep.subr.bf16.mxu0 0
  %1095 = vmatpush1.bf16.msra.mxu0 0
  %1096 = vmatprep.subr.bf16.mxu0 0
  %1097 = vmatpush1.bf16.msra.mxu0 0
  %1098 = vmatprep.mubr.bf16.mxu0 0
  %1099 = vmatmul.mubr.bf16.gmra.mrb[0].mxu0 %v1054
  %v1100 = vpop.f32.mrb[0].mxu0
  %v1101 = vadd.f32 %v1025, %v1100
  %v1102 = vpop.f32.mrb[0].mxu0
  %v1103 = vadd.f32 %v1025, %v1102
  %v1104 = vpop.f32.mrb[0].mxu0
  %v1105 = vadd.f32 %v1030, %v1104
  %v1106 = vpop.f32.mrb[0].mxu0
  %v1107 = vadd.f32 %v1030, %v1106
  %1108 = vmatprep.mubr.bf16.mxu0 0
  %1109 = vmatmul.mubr.bf16.gmra.mrb[0].mxu0 %v1057
  %v1110 = vpop.f32.mrb[0].mxu0
  %v1111 = vadd.f32 %v1035, %v1110
  %v1112 = vpop.f32.mrb[0].mxu0
  %v1113 = vadd.f32 %v1035, %v1112
  %v1114 = vpop.f32.mrb[0].mxu0
  %v1115 = vadd.f32 %v1040, %v1114
  %v1116 = vpop.f32.mrb[0].mxu0
  %v1117 = vadd.f32 %v1040, %v1116
  %1118 = vdwg.mxu0
  %v1119 = vpack.c.bf16 %v1105, %v1101
  %v1120 = vpack.c.bf16 %v1107, %v1103
  %v1121 = vpack.c.bf16 %v1115, %v1111
  %v1122 = vpack.c.bf16 %v1117, %v1113
  %v1123 = vld [vmem:[%s4] sm:$0xf]
  %v1124 = vld [vmem:[%s4 + $0x4] sm:$0xf]
  %v1125 = vld [vmem:[%s4 + $0x8] sm:$0xf]
  %v1126 = vld [vmem:[%s4 + $0xc] sm:$0xf]
  %v1127 = vld [vmem:[%s4 + $0x10] sm:$0xf]
  %v1128 = vld [vmem:[%s4 + $0x14] sm:$0xf]
  %v1129 = vld [vmem:[%s4 + $0x18] sm:$0xf]
  %v1130 = vld [vmem:[%s4 + $0x1c] sm:$0xf]
  %v1131 = vld [vmem:[%s4 + $0x20] sm:$0xf]
  %v1132 = vld [vmem:[%s4 + $0x24] sm:$0xf]
  %v1133 = vld [vmem:[%s4 + $0x28] sm:$0xf]
  %v1134 = vld [vmem:[%s4 + $0x2c] sm:$0xf]
  %v1135 = vld [vmem:[%s4 + $0x30] sm:$0xf]
  %v1136 = vld [vmem:[%s4 + $0x34] sm:$0xf]
  %v1137 = vld [vmem:[%s4 + $0x38] sm:$0xf]
  %v1138 = vld [vmem:[%s4 + $0x3c] sm:$0xf]
  %v1139 = vld [vmem:[%s4 + $0x40] sm:$0xf]
  %v1140 = vld [vmem:[%s4 + $0x44] sm:$0xf]
  %v1141 = vld [vmem:[%s4 + $0x48] sm:$0xf]
  %v1142 = vld [vmem:[%s4 + $0x4c] sm:$0xf]
  %v1143 = vld [vmem:[%s4 + $0x50] sm:$0xf]
  %v1144 = vld [vmem:[%s4 + $0x54] sm:$0xf]
  %v1145 = vld [vmem:[%s4 + $0x58] sm:$0xf]
  %v1146 = vld [vmem:[%s4 + $0x5c] sm:$0xf]
  %v1147 = vld [vmem:[%s4 + $0x60] sm:$0xf]
  %v1148 = vld [vmem:[%s4 + $0x64] sm:$0xf]
  %v1149 = vld [vmem:[%s4 + $0x68] sm:$0xf]
  %v1150 = vld [vmem:[%s4 + $0x6c] sm:$0xf]
  %v1151 = vld [vmem:[%s4 + $0x70] sm:$0xf]
  %v1152 = vld [vmem:[%s4 + $0x74] sm:$0xf]
  %v1153 = vld [vmem:[%s4 + $0x78] sm:$0xf]
  %v1154 = vld [vmem:[%s4 + $0x7c] sm:$0xf]
  %v1187 = vunpack.c.l.b16 %v1123
  %v1188 = vunpack.c.l.b16 %v1124
  %v1189 = vunpack.c.l.b16 %v1125
  %v1190 = vunpack.c.l.b16 %v1126
  %v1191 = vunpack.c.l.b16 %v1127
  %v1192 = vunpack.c.l.b16 %v1128
  %v1193 = vunpack.c.l.b16 %v1129
  %v1194 = vunpack.c.l.b16 %v1130
  %v1195 = vunpack.c.l.b16 %v1131
  %v1196 = vunpack.c.l.b16 %v1132
  %v1197 = vunpack.c.l.b16 %v1133
  %v1198 = vunpack.c.l.b16 %v1134
  %v1199 = vunpack.c.l.b16 %v1135
  %v1200 = vunpack.c.l.b16 %v1136
  %v1201 = vunpack.c.l.b16 %v1137
  %v1202 = vunpack.c.l.b16 %v1138
  %v1203 = vunpack.c.l.b16 %v1139
  %v1204 = vunpack.c.l.b16 %v1140
  %v1205 = vunpack.c.l.b16 %v1141
  %v1206 = vunpack.c.l.b16 %v1142
  %v1207 = vunpack.c.l.b16 %v1143
  %v1208 = vunpack.c.l.b16 %v1144
  %v1209 = vunpack.c.l.b16 %v1145
  %v1210 = vunpack.c.l.b16 %v1146
  %v1211 = vunpack.c.l.b16 %v1147
  %v1212 = vunpack.c.l.b16 %v1148
  %v1213 = vunpack.c.l.b16 %v1149
  %v1214 = vunpack.c.l.b16 %v1150
  %v1215 = vunpack.c.l.b16 %v1151
  %v1216 = vunpack.c.l.b16 %v1152
  %v1217 = vunpack.c.l.b16 %v1153
  %v1218 = vunpack.c.l.b16 %v1154
  %v1219 = vpack.c.b16 %v1188, %v1187
  %v1220 = vpack.c.b16 %v1190, %v1189
  %v1221 = vpack.c.b16 %v1192, %v1191
  %v1222 = vpack.c.b16 %v1194, %v1193
  %v1223 = vpack.c.b16 %v1196, %v1195
  %v1224 = vpack.c.b16 %v1198, %v1197
  %v1225 = vpack.c.b16 %v1200, %v1199
  %v1226 = vpack.c.b16 %v1202, %v1201
  %v1227 = vpack.c.b16 %v1204, %v1203
  %v1228 = vpack.c.b16 %v1206, %v1205
  %v1229 = vpack.c.b16 %v1208, %v1207
  %v1230 = vpack.c.b16 %v1210, %v1209
  %v1231 = vpack.c.b16 %v1212, %v1211
  %v1232 = vpack.c.b16 %v1214, %v1213
  %v1233 = vpack.c.b16 %v1216, %v1215
  %v1234 = vpack.c.b16 %v1218, %v1217
  %1251 = vmatprep.subr.bf16.mxu0 0
  %1252 = vmatpush1.bf16.msra.mxu0 %v1219
  %1253 = vmatprep.subr.bf16.mxu0 0
  %1254 = vmatpush1.bf16.msra.mxu0 %v1220
  %1255 = vmatprep.subr.bf16.mxu0 0
  %1256 = vmatpush1.bf16.msra.mxu0 %v1221
  %1257 = vmatprep.subr.bf16.mxu0 0
  %1258 = vmatpush1.bf16.msra.mxu0 %v1222
  %1259 = vmatprep.subr.bf16.mxu0 0
  %1260 = vmatpush1.bf16.msra.mxu0 %v1223
  %1261 = vmatprep.subr.bf16.mxu0 0
  %1262 = vmatpush1.bf16.msra.mxu0 %v1224
  %1263 = vmatprep.subr.bf16.mxu0 0
  %1264 = vmatpush1.bf16.msra.mxu0 %v1225
  %1265 = vmatprep.subr.bf16.mxu0 0
  %1266 = vmatpush1.bf16.msra.mxu0 %v1226
  %1267 = vmatprep.subr.bf16.mxu0 0
  %1268 = vmatpush1.bf16.msra.mxu0 %v1227
  %1269 = vmatprep.subr.bf16.mxu0 0
  %1270 = vmatpush1.bf16.msra.mxu0 %v1228
  %1271 = vmatprep.subr.bf16.mxu0 0
  %1272 = vmatpush1.bf16.msra.mxu0 %v1229
  %1273 = vmatprep.subr.bf16.mxu0 0
  %1274 = vmatpush1.bf16.msra.mxu0 %v1230
  %1275 = vmatprep.subr.bf16.mxu0 0
  %1276 = vmatpush1.bf16.msra.mxu0 %v1231
  %1277 = vmatprep.subr.bf16.mxu0 0
  %1278 = vmatpush1.bf16.msra.mxu0 %v1232
  %1279 = vmatprep.subr.bf16.mxu0 0
  %1280 = vmatpush1.bf16.msra.mxu0 %v1233
  %1281 = vmatprep.subr.bf16.mxu0 0
  %1282 = vmatpush1.bf16.msra.mxu0 %v1234
  %1283 = vmatprep.mubr.bf16.mxu0 %v1120
  %1284 = vmatmul.mubr.bf16.gmra.mrb[0].mxu0 %v1119
  %v1285 = vpop.f32.mrb[0].mxu0
  %v1286 = vadd.f32 0.0, %v1285
  %v1287 = vpop.f32.mrb[0].mxu0
  %v1288 = vpop.f32.mrb[0].mxu0
  %v1289 = vadd.f32 0.0, %v1288
  %v1290 = vpop.f32.mrb[0].mxu0
  %1291 = vmatprep.mubr.bf16.mxu0 %v1122
  %1292 = vmatmul.mubr.bf16.gmra.mrb[0].mxu0 %v1121
  %v1293 = vpop.f32.mrb[0].mxu0
  %v1294 = vadd.f32 0.0, %v1293
  %v1295 = vpop.f32.mrb[0].mxu0
  %v1296 = vpop.f32.mrb[0].mxu0
  %v1297 = vadd.f32 0.0, %v1296
  %v1298 = vpop.f32.mrb[0].mxu0
  %1299 = vdwg.mxu0
  %v1300 = vld [vmem:[%s5] sm:$0xf]
  %v1301 = vld [vmem:[%s5 + $0x4] sm:$0xf]
  %v1302 = vld [vmem:[%s5 + $0x8] sm:$0xf]
  %v1303 = vld [vmem:[%s5 + $0xc] sm:$0xf]
  %v1304 = vld [vmem:[%s5 + $0x10] sm:$0xf]
  %v1305 = vld [vmem:[%s5 + $0x14] sm:$0xf]
  %v1306 = vld [vmem:[%s5 + $0x18] sm:$0xf]
  %v1307 = vld [vmem:[%s5 + $0x1c] sm:$0xf]
  %v1308 = vpack.c.bf16 %v1289, %v1286
  %v1309 = vpack.c.bf16 %v1297, %v1294
  %v1310 = vld [vmem:[%s6] sm:$0xff]
  %v1311 = vld [vmem:[%s6 + $0x8] sm:$0xff]
  %v1312 = vld [vmem:[%s6 + $0x10] sm:$0xff]
  %v1313 = vld [vmem:[%s6 + $0x18] sm:$0xff]
  %v1314 = vld [vmem:[%s6 + $0x20] sm:$0xff]
  %v1315 = vld [vmem:[%s6 + $0x28] sm:$0xff]
  %v1316 = vld [vmem:[%s6 + $0x30] sm:$0xff]
  %v1317 = vld [vmem:[%s6 + $0x38] sm:$0xff]
  %1319 = vset.pattern.permute.xlu0 0
  %1320 = vperm.xlu0 %1319, %v1310
  %v1321 = vpop.permute.xlu0 %1320
  %1324 = vset.pattern.permute.xlu0 0
  %1325 = vperm.xlu0 %1324, %v1311
  %v1326 = vpop.permute.xlu0 %1325
  %1329 = vset.pattern.permute.xlu0 0
  %1330 = vperm.xlu0 %1329, %v1312
  %v1331 = vpop.permute.xlu0 %1330
  %1334 = vset.pattern.permute.xlu0 0
  %1335 = vperm.xlu0 %1334, %v1313
  %v1336 = vpop.permute.xlu0 %1335
  %1339 = vset.pattern.permute.xlu0 0
  %1340 = vperm.xlu0 %1339, %v1314
  %v1341 = vpop.permute.xlu0 %1340
  %1344 = vset.pattern.permute.xlu0 0
  %1345 = vperm.xlu0 %1344, %v1315
  %v1346 = vpop.permute.xlu0 %1345
  %1349 = vset.pattern.permute.xlu0 0
  %1350 = vperm.xlu0 %1349, %v1316
  %v1351 = vpop.permute.xlu0 %1350
  %1354 = vset.pattern.permute.xlu0 0
  %1355 = vperm.xlu0 %1354, %v1317
  %v1356 = vpop.permute.xlu0 %1355
  %v1366 = vunpack.c.l.b16 %v1300
  %v1367 = vunpack.c.l.b16 %v1301
  %v1368 = vunpack.c.l.b16 %v1302
  %v1369 = vunpack.c.l.b16 %v1303
  %v1370 = vunpack.c.l.b16 %v1304
  %v1371 = vunpack.c.l.b16 %v1305
  %v1372 = vunpack.c.l.b16 %v1306
  %v1373 = vunpack.c.l.b16 %v1307
  %v1374 = vpack.c.b16 %v1367, %v1366
  %v1375 = vpack.c.b16 %v1369, %v1368
  %v1376 = vpack.c.b16 %v1371, %v1370
  %v1377 = vpack.c.b16 %v1373, %v1372
  %vm1378 = vcmask 261120
  %v1380 = vsel %vm1378, %v1374, 0
  %v1383 = vsel %vm1378, %v1375, 0
  %v1386 = vsel %vm1378, %v1376, 0
  %v1389 = vsel %vm1378, %v1377, 0
  %1391 = vmatprep.subr.bf16.mxu0 0
  %1392 = vmatpush1.bf16.msra.mxu0 %v1308
  %1393 = vmatprep.subr.bf16.mxu0 0
  %1394 = vmatpush1.bf16.msra.mxu0 %v1309
  %1395 = vmatprep.subr.bf16.mxu0 0
  %1396 = vmatpush1.bf16.msra.mxu0 0
  %1397 = vmatprep.subr.bf16.mxu0 0
  %1398 = vmatpush1.bf16.msra.mxu0 0
  %1399 = vmatprep.subr.bf16.mxu0 0
  %1400 = vmatpush1.bf16.msra.mxu0 0
  %1401 = vmatprep.subr.bf16.mxu0 0
  %1402 = vmatpush1.bf16.msra.mxu0 0
  %1403 = vmatprep.subr.bf16.mxu0 0
  %1404 = vmatpush1.bf16.msra.mxu0 0
  %1405 = vmatprep.subr.bf16.mxu0 0
  %1406 = vmatpush1.bf16.msra.mxu0 0
  %1407 = vmatprep.subr.bf16.mxu0 0
  %1408 = vmatpush1.bf16.msra.mxu0 0
  %1409 = vmatprep.subr.bf16.mxu0 0
  %1410 = vmatpush1.bf16.msra.mxu0 0
  %1411 = vmatprep.subr.bf16.mxu0 0
  %1412 = vmatpush1.bf16.msra.mxu0 0
  %1413 = vmatprep.subr.bf16.mxu0 0
  %1414 = vmatpush1.bf16.msra.mxu0 0
  %1415 = vmatprep.subr.bf16.mxu0 0
  %1416 = vmatpush1.bf16.msra.mxu0 0
  %1417 = vmatprep.subr.bf16.mxu0 0
  %1418 = vmatpush1.bf16.msra.mxu0 0
  %1419 = vmatprep.subr.bf16.mxu0 0
  %1420 = vmatpush1.bf16.msra.mxu0 0
  %1421 = vmatprep.subr.bf16.mxu0 0
  %1422 = vmatpush1.bf16.msra.mxu0 0
  %1423 = vmatprep.mubr.bf16.mxu0 0
  %1424 = vmatmul.mubr.bf16.gmra.mrb[0].mxu0 %v1380
  %v1425 = vpop.f32.mrb[0].mxu0
  %v1426 = vadd.f32 %v1321, %v1425
  %v1427 = vpop.f32.mrb[0].mxu0
  %v1428 = vpop.f32.mrb[0].mxu0
  %v1429 = vadd.f32 %v1326, %v1428
  %v1430 = vpop.f32.mrb[0].mxu0
  %1431 = vmatprep.mubr.bf16.mxu0 0
  %1432 = vmatmul.mubr.bf16.gmra.mrb[0].mxu0 %v1383
  %v1433 = vpop.f32.mrb[0].mxu0
  %v1434 = vadd.f32 %v1331, %v1433
  %v1435 = vpop.f32.mrb[0].mxu0
  %v1436 = vpop.f32.mrb[0].mxu0
  %v1437 = vadd.f32 %v1336, %v1436
  %v1438 = vpop.f32.mrb[0].mxu0
  %1439 = vmatprep.mubr.bf16.mxu0 0
  %1440 = vmatmul.mubr.bf16.gmra.mrb[0].mxu0 %v1386
  %v1441 = vpop.f32.mrb[0].mxu0
  %v1442 = vadd.f32 %v1341, %v1441
  %v1443 = vpop.f32.mrb[0].mxu0
  %v1444 = vpop.f32.mrb[0].mxu0
  %v1445 = vadd.f32 %v1346, %v1444
  %v1446 = vpop.f32.mrb[0].mxu0
  %1447 = vmatprep.mubr.bf16.mxu0 0
  %1448 = vmatmul.mubr.bf16.gmra.mrb[0].mxu0 %v1389
  %v1449 = vpop.f32.mrb[0].mxu0
  %v1450 = vadd.f32 %v1351, %v1449
  %v1451 = vpop.f32.mrb[0].mxu0
  %v1452 = vpop.f32.mrb[0].mxu0
  %v1453 = vadd.f32 %v1356, %v1452
  %v1454 = vpop.f32.mrb[0].mxu0
  %1455 = vdwg.mxu0
  %v1456 = vpack.c.bf16 %v1429, %v1426
  %v1457 = vpack.c.bf16 %v1437, %v1434
  %v1458 = vpack.c.bf16 %v1445, %v1442
  %v1459 = vpack.c.bf16 %v1453, %v1450
  %v1460 = vld [vmem:[%s7] sm:$0xf]
  %v1461 = vld [vmem:[%s7 + $0x4] sm:$0xf]
  %v1462 = vld [vmem:[%s7 + $0x8] sm:$0xf]
  %v1463 = vld [vmem:[%s7 + $0xc] sm:$0xf]
  %v1464 = vld [vmem:[%s7 + $0x10] sm:$0xf]
  %v1465 = vld [vmem:[%s7 + $0x14] sm:$0xf]
  %v1466 = vld [vmem:[%s7 + $0x18] sm:$0xf]
  %v1467 = vld [vmem:[%s7 + $0x1c] sm:$0xf]
  %v1476 = vunpack.c.l.b16 %v1460
  %v1477 = vunpack.c.l.b16 %v1461
  %v1478 = vunpack.c.l.b16 %v1462
  %v1479 = vunpack.c.l.b16 %v1463
  %v1480 = vunpack.c.l.b16 %v1464
  %v1481 = vunpack.c.l.b16 %v1465
  %v1482 = vunpack.c.l.b16 %v1466
  %v1483 = vunpack.c.l.b16 %v1467
  %v1484 = vpack.c.b16 %v1477, %v1476
  %v1485 = vpack.c.b16 %v1479, %v1478
  %v1486 = vpack.c.b16 %v1481, %v1480
  %v1487 = vpack.c.b16 %v1483, %v1482
  %vm1492 = vcmask 523264
  %v1494 = vsel %vm1492, %v1456, 0
  %v1497 = vsel %vm1492, %v1457, 0
  %v1500 = vsel %vm1492, %v1458, 0
  %v1503 = vsel %vm1492, %v1459, 0
  %1505 = vmatprep.subr.bf16.mxu0 0
  %1506 = vmatpush1.bf16.msra.mxu0 %v1484
  %1507 = vmatprep.subr.bf16.mxu0 0
  %1508 = vmatpush1.bf16.msra.mxu0 %v1485
  %1509 = vmatprep.subr.bf16.mxu0 0
  %1510 = vmatpush1.bf16.msra.mxu0 %v1486
  %1511 = vmatprep.subr.bf16.mxu0 0
  %1512 = vmatpush1.bf16.msra.mxu0 %v1487
  %1513 = vmatprep.subr.bf16.mxu0 0
  %1514 = vmatpush1.bf16.msra.mxu0 0
  %1515 = vmatprep.subr.bf16.mxu0 0
  %1516 = vmatpush1.bf16.msra.mxu0 0
  %1517 = vmatprep.subr.bf16.mxu0 0
  %1518 = vmatpush1.bf16.msra.mxu0 0
  %1519 = vmatprep.subr.bf16.mxu0 0
  %1520 = vmatpush1.bf16.msra.mxu0 0
  %1521 = vmatprep.subr.bf16.mxu0 0
  %1522 = vmatpush1.bf16.msra.mxu0 0
  %1523 = vmatprep.subr.bf16.mxu0 0
  %1524 = vmatpush1.bf16.msra.mxu0 0
  %1525 = vmatprep.subr.bf16.mxu0 0
  %1526 = vmatpush1.bf16.msra.mxu0 0
  %1527 = vmatprep.subr.bf16.mxu0 0
  %1528 = vmatpush1.bf16.msra.mxu0 0
  %1529 = vmatprep.subr.bf16.mxu0 0
  %1530 = vmatpush1.bf16.msra.mxu0 0
  %1531 = vmatprep.subr.bf16.mxu0 0
  %1532 = vmatpush1.bf16.msra.mxu0 0
  %1533 = vmatprep.subr.bf16.mxu0 0
  %1534 = vmatpush1.bf16.msra.mxu0 0
  %1535 = vmatprep.subr.bf16.mxu0 0
  %1536 = vmatpush1.bf16.msra.mxu0 0
  %1537 = vmatprep.mubr.bf16.mxu0 0
  %1538 = vmatmul.mubr.bf16.gmra.mrb[0].mxu0 %v1494
  %v1539 = vpop.f32.mrb[0].mxu0
  %v1540 = vadd.f32 0.0, %v1539
  %v1541 = vpop.f32.mrb[0].mxu0
  %v1542 = vpop.f32.mrb[0].mxu0
  %v1543 = vadd.f32 0.0, %v1542
  %v1544 = vpop.f32.mrb[0].mxu0
  %1545 = vmatprep.mubr.bf16.mxu0 0
  %1546 = vmatmul.mubr.bf16.gmra.mrb[0].mxu0 %v1497
  %v1547 = vpop.f32.mrb[0].mxu0
  %v1548 = vadd.f32 0.0, %v1547
  %v1549 = vpop.f32.mrb[0].mxu0
  %v1550 = vpop.f32.mrb[0].mxu0
  %v1551 = vadd.f32 0.0, %v1550
  %v1552 = vpop.f32.mrb[0].mxu0
  %1553 = vmatprep.mubr.bf16.mxu0 0
  %1554 = vmatmul.mubr.bf16.gmra.mrb[0].mxu0 %v1500
  %v1555 = vpop.f32.mrb[0].mxu0
  %v1556 = vadd.f32 0.0, %v1555
  %v1557 = vpop.f32.mrb[0].mxu0
  %v1558 = vpop.f32.mrb[0].mxu0
  %v1559 = vadd.f32 0.0, %v1558
  %v1560 = vpop.f32.mrb[0].mxu0
  %1561 = vmatprep.mubr.bf16.mxu0 0
  %1562 = vmatmul.mubr.bf16.gmra.mrb[0].mxu0 %v1503
  %v1563 = vpop.f32.mrb[0].mxu0
  %v1564 = vadd.f32 0.0, %v1563
  %v1565 = vpop.f32.mrb[0].mxu0
  %v1566 = vpop.f32.mrb[0].mxu0
  %v1567 = vadd.f32 0.0, %v1566
  %v1568 = vpop.f32.mrb[0].mxu0
  %1569 = vdwg.mxu0
  %v1570 = vld [vmem:[%s8] sm:$0xf]
  %v1571 = vld [vmem:[%s8 + $0x4] sm:$0xf]
  %v1572 = vld [vmem:[%s8 + $0x8] sm:$0xf]
  %v1573 = vld [vmem:[%s8 + $0xc] sm:$0xf]
  %v1574 = vld [vmem:[%s8 + $0x10] sm:$0xf]
  %v1575 = vld [vmem:[%s8 + $0x14] sm:$0xf]
  %v1576 = vld [vmem:[%s8 + $0x18] sm:$0xf]
  %v1577 = vld [vmem:[%s8 + $0x1c] sm:$0xf]
  %v1578 = vld [vmem:[%s8 + $0x20] sm:$0xf]
  %v1579 = vld [vmem:[%s8 + $0x24] sm:$0xf]
  %v1580 = vld [vmem:[%s8 + $0x28] sm:$0xf]
  %v1581 = vld [vmem:[%s8 + $0x2c] sm:$0xf]
  %v1582 = vld [vmem:[%s8 + $0x30] sm:$0xf]
  %v1583 = vld [vmem:[%s8 + $0x34] sm:$0xf]
  %v1584 = vld [vmem:[%s8 + $0x38] sm:$0xf]
  %v1585 = vld [vmem:[%s8 + $0x3c] sm:$0xf]
  %v1586 = vpack.c.bf16 %v1543, %v1540
  %v1587 = vpack.c.bf16 %v1551, %v1548
  %v1588 = vpack.c.bf16 %v1559, %v1556
  %v1589 = vpack.c.bf16 %v1567, %v1564
  %v1590 = vld [vmem:[%s9] sm:$0xff]
  %v1591 = vld [vmem:[%s9 + $0x8] sm:$0xff]
  %v1592 = vld [vmem:[%s9 + $0x10] sm:$0xff]
  %v1593 = vld [vmem:[%s9 + $0x18] sm:$0xff]
  %v1594 = vld [vmem:[%s9 + $0x20] sm:$0xff]
  %v1595 = vld [vmem:[%s9 + $0x28] sm:$0xff]
  %v1596 = vld [vmem:[%s9 + $0x30] sm:$0xff]
  %v1597 = vld [vmem:[%s9 + $0x38] sm:$0xff]
  %v1598 = vld [vmem:[%s9 + $0x40] sm:$0xff]
  %v1599 = vld [vmem:[%s9 + $0x48] sm:$0xff]
  %v1600 = vld [vmem:[%s9 + $0x50] sm:$0xff]
  %v1601 = vld [vmem:[%s9 + $0x58] sm:$0xff]
  %v1602 = vld [vmem:[%s9 + $0x60] sm:$0xff]
  %v1603 = vld [vmem:[%s9 + $0x68] sm:$0xff]
  %v1604 = vld [vmem:[%s9 + $0x70] sm:$0xff]
  %v1605 = vld [vmem:[%s9 + $0x78] sm:$0xff]
  %1607 = vset.pattern.permute.xlu0 0
  %1608 = vperm.xlu0 %1607, %v1590
  %v1609 = vpop.permute.xlu0 %1608
  %1612 = vset.pattern.permute.xlu0 0
  %1613 = vperm.xlu0 %1612, %v1591
  %v1614 = vpop.permute.xlu0 %1613
  %1617 = vset.pattern.permute.xlu0 0
  %1618 = vperm.xlu0 %1617, %v1592
  %v1619 = vpop.permute.xlu0 %1618
  %1622 = vset.pattern.permute.xlu0 0
  %1623 = vperm.xlu0 %1622, %v1593
  %v1624 = vpop.permute.xlu0 %1623
  %1627 = vset.pattern.permute.xlu0 0
  %1628 = vperm.xlu0 %1627, %v1594
  %v1629 = vpop.permute.xlu0 %1628
  %1632 = vset.pattern.permute.xlu0 0
  %1633 = vperm.xlu0 %1632, %v1595
  %v1634 = vpop.permute.xlu0 %1633
  %1637 = vset.pattern.permute.xlu0 0
  %1638 = vperm.xlu0 %1637, %v1596
  %v1639 = vpop.permute.xlu0 %1638
  %1642 = vset.pattern.permute.xlu0 0
  %1643 = vperm.xlu0 %1642, %v1597
  %v1644 = vpop.permute.xlu0 %1643
  %1647 = vset.pattern.permute.xlu0 0
  %1648 = vperm.xlu0 %1647, %v1598
  %v1649 = vpop.permute.xlu0 %1648
  %1652 = vset.pattern.permute.xlu0 0
  %1653 = vperm.xlu0 %1652, %v1599
  %v1654 = vpop.permute.xlu0 %1653
  %1657 = vset.pattern.permute.xlu0 0
  %1658 = vperm.xlu0 %1657, %v1600
  %v1659 = vpop.permute.xlu0 %1658
  %1662 = vset.pattern.permute.xlu0 0
  %1663 = vperm.xlu0 %1662, %v1601
  %v1664 = vpop.permute.xlu0 %1663
  %1667 = vset.pattern.permute.xlu0 0
  %1668 = vperm.xlu0 %1667, %v1602
  %v1669 = vpop.permute.xlu0 %1668
  %1672 = vset.pattern.permute.xlu0 0
  %1673 = vperm.xlu0 %1672, %v1603
  %v1674 = vpop.permute.xlu0 %1673
  %1677 = vset.pattern.permute.xlu0 0
  %1678 = vperm.xlu0 %1677, %v1604
  %v1679 = vpop.permute.xlu0 %1678
  %1682 = vset.pattern.permute.xlu0 0
  %1683 = vperm.xlu0 %1682, %v1605
  %v1684 = vpop.permute.xlu0 %1683
  %v1702 = vunpack.c.l.b16 %v1570
  %v1703 = vunpack.c.l.b16 %v1571
  %v1704 = vunpack.c.l.b16 %v1572
  %v1705 = vunpack.c.l.b16 %v1573
  %v1706 = vunpack.c.l.b16 %v1574
  %v1707 = vunpack.c.l.b16 %v1575
  %v1708 = vunpack.c.l.b16 %v1576
  %v1709 = vunpack.c.l.b16 %v1577
  %v1710 = vunpack.c.l.b16 %v1578
  %v1711 = vunpack.c.l.b16 %v1579
  %v1712 = vunpack.c.l.b16 %v1580
  %v1713 = vunpack.c.l.b16 %v1581
  %v1714 = vunpack.c.l.b16 %v1582
  %v1715 = vunpack.c.l.b16 %v1583
  %v1716 = vunpack.c.l.b16 %v1584
  %v1717 = vunpack.c.l.b16 %v1585
  %v1718 = vpack.c.b16 %v1703, %v1702
  %v1719 = vpack.c.b16 %v1705, %v1704
  %v1720 = vpack.c.b16 %v1707, %v1706
  %v1721 = vpack.c.b16 %v1709, %v1708
  %v1722 = vpack.c.b16 %v1711, %v1710
  %v1723 = vpack.c.b16 %v1713, %v1712
  %v1724 = vpack.c.b16 %v1715, %v1714
  %v1725 = vpack.c.b16 %v1717, %v1716
  %v1727 = vsel %vm1492, %v1718, 0
  %v1730 = vsel %vm1492, %v1719, 0
  %v1733 = vsel %vm1492, %v1720, 0
  %v1736 = vsel %vm1492, %v1721, 0
  %v1739 = vsel %vm1492, %v1722, 0
  %v1742 = vsel %vm1492, %v1723, 0
  %v1745 = vsel %vm1492, %v1724, 0
  %v1748 = vsel %vm1492, %v1725, 0
  %1750 = vmatprep.subr.bf16.mxu0 0
  %1751 = vmatpush1.bf16.msra.mxu0 %v1586
  %1752 = vmatprep.subr.bf16.mxu0 0
  %1753 = vmatpush1.bf16.msra.mxu0 %v1587
  %1754 = vmatprep.subr.bf16.mxu0 0
  %1755 = vmatpush1.bf16.msra.mxu0 %v1588
  %1756 = vmatprep.subr.bf16.mxu0 0
  %1757 = vmatpush1.bf16.msra.mxu0 %v1589
  %1758 = vmatprep.subr.bf16.mxu0 0
  %1759 = vmatpush1.bf16.msra.mxu0 0
  %1760 = vmatprep.subr.bf16.mxu0 0
  %1761 = vmatpush1.bf16.msra.mxu0 0
  %1762 = vmatprep.subr.bf16.mxu0 0
  %1763 = vmatpush1.bf16.msra.mxu0 0
  %1764 = vmatprep.subr.bf16.mxu0 0
  %1765 = vmatpush1.bf16.msra.mxu0 0
  %1766 = vmatprep.subr.bf16.mxu0 0
  %1767 = vmatpush1.bf16.msra.mxu0 0
  %1768 = vmatprep.subr.bf16.mxu0 0
  %1769 = vmatpush1.bf16.msra.mxu0 0
  %1770 = vmatprep.subr.bf16.mxu0 0
  %1771 = vmatpush1.bf16.msra.mxu0 0
  %1772 = vmatprep.subr.bf16.mxu0 0
  %1773 = vmatpush1.bf16.msra.mxu0 0
  %1774 = vmatprep.subr.bf16.mxu0 0
  %1775 = vmatpush1.bf16.msra.mxu0 0
  %1776 = vmatprep.subr.bf16.mxu0 0
  %1777 = vmatpush1.bf16.msra.mxu0 0
  %1778 = vmatprep.subr.bf16.mxu0 0
  %1779 = vmatpush1.bf16.msra.mxu0 0
  %1780 = vmatprep.subr.bf16.mxu0 0
  %1781 = vmatpush1.bf16.msra.mxu0 0
  %1782 = vmatprep.mubr.bf16.mxu0 0
  %1783 = vmatmul.mubr.bf16.gmra.mrb[0].mxu0 %v1727
  %v1784 = vpop.f32.mrb[0].mxu0
  %v1785 = vadd.f32 %v1609, %v1784
  %v1786 = vpop.f32.mrb[0].mxu0
  %v1787 = vpop.f32.mrb[0].mxu0
  %v1788 = vadd.f32 %v1614, %v1787
  %v1789 = vpop.f32.mrb[0].mxu0
  %1790 = vmatprep.mubr.bf16.mxu0 0
  %1791 = vmatmul.mubr.bf16.gmra.mrb[0].mxu0 %v1730
  %v1792 = vpop.f32.mrb[0].mxu0
  %v1793 = vadd.f32 %v1619, %v1792
  %v1794 = vpop.f32.mrb[0].mxu0
  %v1795 = vpop.f32.mrb[0].mxu0
  %v1796 = vadd.f32 %v1624, %v1795
  %v1797 = vpop.f32.mrb[0].mxu0
  %1798 = vmatprep.mubr.bf16.mxu0 0
  %1799 = vmatmul.mubr.bf16.gmra.mrb[0].mxu0 %v1733
  %v1800 = vpop.f32.mrb[0].mxu0
  %v1801 = vadd.f32 %v1629, %v1800
  %v1802 = vpop.f32.mrb[0].mxu0
  %v1803 = vpop.f32.mrb[0].mxu0
  %v1804 = vadd.f32 %v1634, %v1803
  %v1805 = vpop.f32.mrb[0].mxu0
  %1806 = vmatprep.mubr.bf16.mxu0 0
  %1807 = vmatmul.mubr.bf16.gmra.mrb[0].mxu0 %v1736
  %v1808 = vpop.f32.mrb[0].mxu0
  %v1809 = vadd.f32 %v1639, %v1808
  %v1810 = vpop.f32.mrb[0].mxu0
  %v1811 = vpop.f32.mrb[0].mxu0
  %v1812 = vadd.f32 %v1644, %v1811
  %v1813 = vpop.f32.mrb[0].mxu0
  %1814 = vmatprep.mubr.bf16.mxu0 0
  %1815 = vmatmul.mubr.bf16.gmra.mrb[0].mxu0 %v1739
  %v1816 = vpop.f32.mrb[0].mxu0
  %v1817 = vadd.f32 %v1649, %v1816
  %v1818 = vpop.f32.mrb[0].mxu0
  %v1819 = vpop.f32.mrb[0].mxu0
  %v1820 = vadd.f32 %v1654, %v1819
  %v1821 = vpop.f32.mrb[0].mxu0
  %1822 = vmatprep.mubr.bf16.mxu0 0
  %1823 = vmatmul.mubr.bf16.gmra.mrb[0].mxu0 %v1742
  %v1824 = vpop.f32.mrb[0].mxu0
  %v1825 = vadd.f32 %v1659, %v1824
  %v1826 = vpop.f32.mrb[0].mxu0
  %v1827 = vpop.f32.mrb[0].mxu0
  %v1828 = vadd.f32 %v1664, %v1827
  %v1829 = vpop.f32.mrb[0].mxu0
  %1830 = vmatprep.mubr.bf16.mxu0 0
  %1831 = vmatmul.mubr.bf16.gmra.mrb[0].mxu0 %v1745
  %v1832 = vpop.f32.mrb[0].mxu0
  %v1833 = vadd.f32 %v1669, %v1832
  %v1834 = vpop.f32.mrb[0].mxu0
  %v1835 = vpop.f32.mrb[0].mxu0
  %v1836 = vadd.f32 %v1674, %v1835
  %v1837 = vpop.f32.mrb[0].mxu0
  %1838 = vmatprep.mubr.bf16.mxu0 0
  %1839 = vmatmul.mubr.bf16.gmra.mrb[0].mxu0 %v1748
  %v1840 = vpop.f32.mrb[0].mxu0
  %v1841 = vadd.f32 %v1679, %v1840
  %v1842 = vpop.f32.mrb[0].mxu0
  %v1843 = vpop.f32.mrb[0].mxu0
  %v1844 = vadd.f32 %v1684, %v1843
  %v1845 = vpop.f32.mrb[0].mxu0
  %1846 = vdwg.mxu0
  %vm1847 = vcmask 130048
  %1848 = vst.msk [vmem:[#allocation2] sm:$0xff] %vm1847, %v1785
  %1850 = vrot.lane.b32.xlu0 %v1788, 16
  %v1851 = vpop.permute.xlu0 %1850
  %vm1853 = vcmask 261248
  %1854 = vst.msk [vmem:[#allocation2] sm:$0xff] %vm1853, %v1851
  %1856 = vrot.lane.b32.xlu0 %v1793, 32
  %v1857 = vpop.permute.xlu0 %1856
  %vm1859 = vcmask 392448
  %1860 = vst.msk [vmem:[#allocation2] sm:$0xff] %vm1859, %v1857
  %1862 = vrot.lane.b32.xlu0 %v1796, 48
  %v1863 = vpop.permute.xlu0 %1862
  %vm1865 = vcmask 523648
  %1866 = vst.msk [vmem:[#allocation2] sm:$0xff] %vm1865, %v1863
  %1868 = vrot.lane.b32.xlu0 %v1801, 64
  %v1869 = vpop.permute.xlu0 %1868
  %vm1871 = vcmask 654848
  %1872 = vst.msk [vmem:[#allocation2] sm:$0xff] %vm1871, %v1869
  %1874 = vrot.lane.b32.xlu0 %v1804, 80
  %v1875 = vpop.permute.xlu0 %1874
  %vm1877 = vcmask 786048
  %1878 = vst.msk [vmem:[#allocation2] sm:$0xff] %vm1877, %v1875
  %1880 = vrot.lane.b32.xlu0 %v1809, 96
  %v1881 = vpop.permute.xlu0 %1880
  %vm1883 = vcmask 917248
  %1884 = vst.msk [vmem:[#allocation2] sm:$0xff] %vm1883, %v1881
  %1886 = vrot.lane.b32.xlu0 %v1812, 112
  %v1887 = vpop.permute.xlu0 %1886
  %vm1889 = vcmask 1048448
  %1890 = vst.msk [vmem:[#allocation2] sm:$0xff] %vm1889, %v1887
  %1891 = vst.msk [vmem:[#allocation2 + $0x8] sm:$0xff] %vm1847, %v1817
  %1893 = vrot.lane.b32.xlu0 %v1820, 16
  %v1894 = vpop.permute.xlu0 %1893
  %1896 = vst.msk [vmem:[#allocation2 + $0x8] sm:$0xff] %vm1853, %v1894
  %1898 = vrot.lane.b32.xlu0 %v1825, 32
  %v1899 = vpop.permute.xlu0 %1898
  %1901 = vst.msk [vmem:[#allocation2 + $0x8] sm:$0xff] %vm1859, %v1899
  %1903 = vrot.lane.b32.xlu0 %v1828, 48
  %v1904 = vpop.permute.xlu0 %1903
  %1906 = vst.msk [vmem:[#allocation2 + $0x8] sm:$0xff] %vm1865, %v1904
  %1908 = vrot.lane.b32.xlu0 %v1833, 64
  %v1909 = vpop.permute.xlu0 %1908
  %1911 = vst.msk [vmem:[#allocation2 + $0x8] sm:$0xff] %vm1871, %v1909
  %1913 = vrot.lane.b32.xlu0 %v1836, 80
  %v1914 = vpop.permute.xlu0 %1913
  %1916 = vst.msk [vmem:[#allocation2 + $0x8] sm:$0xff] %vm1877, %v1914
  %1918 = vrot.lane.b32.xlu0 %v1841, 96
  %v1919 = vpop.permute.xlu0 %1918
  %1921 = vst.msk [vmem:[#allocation2 + $0x8] sm:$0xff] %vm1883, %v1919
  %1923 = vrot.lane.b32.xlu0 %v1844, 112
  %v1924 = vpop.permute.xlu0 %1923
  %1926 = vst.msk [vmem:[#allocation2 + $0x8] sm:$0xff] %vm1889, %v1924
  %v1927 = vld [vmem:[#allocation2] sm:$0xff]
  %v1928 = vld [vmem:[#allocation2 + $0x8] sm:$0xff]
  %v1929 = vpack.c.bf16 %v1927, %v1927
  %v1930 = vpack.c.bf16 %v1928, %v1928
  %v1931 = vld [vmem:[%s10] sm:$0xf]
  %v1932 = vld [vmem:[%s10 + $0x4] sm:$0xf]
  %v1933 = vld [vmem:[%s10 + $0x8] sm:$0xf]
  %v1934 = vld [vmem:[%s10 + $0xc] sm:$0xf]
  %v1935 = vld [vmem:[%s10 + $0x10] sm:$0xf]
  %v1936 = vld [vmem:[%s10 + $0x14] sm:$0xf]
  %v1937 = vld [vmem:[%s10 + $0x18] sm:$0xf]
  %v1938 = vld [vmem:[%s10 + $0x1c] sm:$0xf]
  %v1939 = vld [vmem:[%s10 + $0x20] sm:$0xf]
  %v1940 = vld [vmem:[%s10 + $0x24] sm:$0xf]
  %v1941 = vld [vmem:[%s10 + $0x28] sm:$0xf]
  %v1942 = vld [vmem:[%s10 + $0x2c] sm:$0xf]
  %v1943 = vld [vmem:[%s10 + $0x30] sm:$0xf]
  %v1944 = vld [vmem:[%s10 + $0x34] sm:$0xf]
  %v1945 = vld [vmem:[%s10 + $0x38] sm:$0xf]
  %v1946 = vld [vmem:[%s10 + $0x3c] sm:$0xf]
  %v1947 = vld [vmem:[%s10 + $0x40] sm:$0xf]
  %v1948 = vld [vmem:[%s10 + $0x44] sm:$0xf]
  %v1949 = vld [vmem:[%s10 + $0x48] sm:$0xf]
  %v1950 = vld [vmem:[%s10 + $0x4c] sm:$0xf]
  %v1951 = vld [vmem:[%s10 + $0x50] sm:$0xf]
  %v1952 = vld [vmem:[%s10 + $0x54] sm:$0xf]
  %v1953 = vld [vmem:[%s10 + $0x58] sm:$0xf]
  %v1954 = vld [vmem:[%s10 + $0x5c] sm:$0xf]
  %v1955 = vld [vmem:[%s10 + $0x60] sm:$0xf]
  %v1956 = vld [vmem:[%s10 + $0x64] sm:$0xf]
  %v1957 = vld [vmem:[%s10 + $0x68] sm:$0xf]
  %v1958 = vld [vmem:[%s10 + $0x6c] sm:$0xf]
  %v1959 = vld [vmem:[%s10 + $0x70] sm:$0xf]
  %v1960 = vld [vmem:[%s10 + $0x74] sm:$0xf]
  %v1961 = vld [vmem:[%s10 + $0x78] sm:$0xf]
  %v1962 = vld [vmem:[%s10 + $0x7c] sm:$0xf]
  %v1963 = vld [vmem:[%s11] sm:$0x1]
  %v1965 = vlaneseq
  %v1966 = vshrl.u32 %v1965, 7
  %v1967 = vsub.s32 0, %v1966
  %v1968 = vrot.slane %v1963, %v1967
  %v2002 = vunpack.c.l.b16 %v1931
  %v2003 = vunpack.c.l.b16 %v1932
  %v2004 = vunpack.c.l.b16 %v1933
  %v2005 = vunpack.c.l.b16 %v1934
  %v2006 = vunpack.c.l.b16 %v1935
  %v2007 = vunpack.c.l.b16 %v1936
  %v2008 = vunpack.c.l.b16 %v1937
  %v2009 = vunpack.c.l.b16 %v1938
  %v2010 = vunpack.c.l.b16 %v1939
  %v2011 = vunpack.c.l.b16 %v1940
  %v2012 = vunpack.c.l.b16 %v1941
  %v2013 = vunpack.c.l.b16 %v1942
  %v2014 = vunpack.c.l.b16 %v1943
  %v2015 = vunpack.c.l.b16 %v1944
  %v2016 = vunpack.c.l.b16 %v1945
  %v2017 = vunpack.c.l.b16 %v1946
  %v2018 = vunpack.c.l.b16 %v1947
  %v2019 = vunpack.c.l.b16 %v1948
  %v2020 = vunpack.c.l.b16 %v1949
  %v2021 = vunpack.c.l.b16 %v1950
  %v2022 = vunpack.c.l.b16 %v1951
  %v2023 = vunpack.c.l.b16 %v1952
  %v2024 = vunpack.c.l.b16 %v1953
  %v2025 = vunpack.c.l.b16 %v1954
  %v2026 = vunpack.c.l.b16 %v1955
  %v2027 = vunpack.c.l.b16 %v1956
  %v2028 = vunpack.c.l.b16 %v1957
  %v2029 = vunpack.c.l.b16 %v1958
  %v2030 = vunpack.c.l.b16 %v1959
  %v2031 = vunpack.c.l.b16 %v1960
  %v2032 = vunpack.c.l.b16 %v1961
  %v2033 = vunpack.c.l.b16 %v1962
  %v2034 = vpack.c.b16 %v2003, %v2002
  %v2035 = vpack.c.b16 %v2005, %v2004
  %v2036 = vpack.c.b16 %v2007, %v2006
  %v2037 = vpack.c.b16 %v2009, %v2008
  %v2038 = vpack.c.b16 %v2011, %v2010
  %v2039 = vpack.c.b16 %v2013, %v2012
  %v2040 = vpack.c.b16 %v2015, %v2014
  %v2041 = vpack.c.b16 %v2017, %v2016
  %v2042 = vpack.c.b16 %v2019, %v2018
  %v2043 = vpack.c.b16 %v2021, %v2020
  %v2044 = vpack.c.b16 %v2023, %v2022
  %v2045 = vpack.c.b16 %v2025, %v2024
  %v2046 = vpack.c.b16 %v2027, %v2026
  %v2047 = vpack.c.b16 %v2029, %v2028
  %v2048 = vpack.c.b16 %v2031, %v2030
  %v2049 = vpack.c.b16 %v2033, %v2032
  %2066 = vmatprep.subr.bf16.mxu0 0
  %2067 = vmatpush1.bf16.msra.mxu0 %v2034
  %2068 = vmatprep.subr.bf16.mxu0 0
  %2069 = vmatpush1.bf16.msra.mxu0 %v2035
  %2070 = vmatprep.subr.bf16.mxu0 0
  %2071 = vmatpush1.bf16.msra.mxu0 %v2036
  %2072 = vmatprep.subr.bf16.mxu0 0
  %2073 = vmatpush1.bf16.msra.mxu0 %v2037
  %2074 = vmatprep.subr.bf16.mxu0 0
  %2075 = vmatpush1.bf16.msra.mxu0 %v2038
  %2076 = vmatprep.subr.bf16.mxu0 0
  %2077 = vmatpush1.bf16.msra.mxu0 %v2039
  %2078 = vmatprep.subr.bf16.mxu0 0
  %2079 = vmatpush1.bf16.msra.mxu0 %v2040
  %2080 = vmatprep.subr.bf16.mxu0 0
  %2081 = vmatpush1.bf16.msra.mxu0 %v2041
  %2082 = vmatprep.subr.bf16.mxu0 0
  %2083 = vmatpush1.bf16.msra.mxu0 %v2042
  %2084 = vmatprep.subr.bf16.mxu0 0
  %2085 = vmatpush1.bf16.msra.mxu0 %v2043
  %2086 = vmatprep.subr.bf16.mxu0 0
  %2087 = vmatpush1.bf16.msra.mxu0 %v2044
  %2088 = vmatprep.subr.bf16.mxu0 0
  %2089 = vmatpush1.bf16.msra.mxu0 %v2045
  %2090 = vmatprep.subr.bf16.mxu0 0
  %2091 = vmatpush1.bf16.msra.mxu0 %v2046
  %2092 = vmatprep.subr.bf16.mxu0 0
  %2093 = vmatpush1.bf16.msra.mxu0 %v2047
  %2094 = vmatprep.subr.bf16.mxu0 0
  %2095 = vmatpush1.bf16.msra.mxu0 %v2048
  %2096 = vmatprep.subr.bf16.mxu0 0
  %2097 = vmatpush1.bf16.msra.mxu0 %v2049
  %2098 = vmatprep.mubr.bf16.mxu0 %v1930
  %2099 = vmatmul.mubr.bf16.gmra.mrb[0].mxu0 %v1929
  %v2100 = vpop.f32.mrb[0].mxu0
  %v2101 = vadd.f32 %v1968, %v2100
  %v2102 = vpop.f32.mrb[0].mxu0
  %v2103 = vpop.f32.mrb[0].mxu0
  %v2104 = vpop.f32.mrb[0].mxu0
  %2105 = vdwg.mxu0
  %v2106 = vpack.c.bf16 %v2101, %v2101
  %v2107 = vld [vmem:[%s12] sm:$0xf]
  %v2108 = vld [vmem:[%s12 + $0x4] sm:$0xf]
  %v2109 = vld [vmem:[%s13] sm:$0x1]
  %v2111 = vlaneseq
  %v2112 = vshrl.u32 %v2111, 7
  %v2113 = vsub.s32 0, %v2112
  %v2114 = vrot.slane %v2109, %v2113
  %v2118 = vunpack.c.l.b16 %v2107
  %v2119 = vunpack.c.l.b16 %v2108
  %v2120 = vpack.c.b16 %v2119, %v2118
  %v2123 = vsel %vm1847, %v2106, 0
  %2125 = vmatprep.subr.bf16.mxu0 0
  %2126 = vmatpush1.bf16.msra.mxu0 %v2120
  %2127 = vmatprep.subr.bf16.mxu0 0
  %2128 = vmatpush1.bf16.msra.mxu0 0
  %2129 = vmatprep.subr.bf16.mxu0 0
  %2130 = vmatpush1.bf16.msra.mxu0 0
  %2131 = vmatprep.subr.bf16.mxu0 0
  %2132 = vmatpush1.bf16.msra.mxu0 0
  %2133 = vmatprep.subr.bf16.mxu0 0
  %2134 = vmatpush1.bf16.msra.mxu0 0
  %2135 = vmatprep.subr.bf16.mxu0 0
  %2136 = vmatpush1.bf16.msra.mxu0 0
  %2137 = vmatprep.subr.bf16.mxu0 0
  %2138 = vmatpush1.bf16.msra.mxu0 0
  %2139 = vmatprep.subr.bf16.mxu0 0
  %2140 = vmatpush1.bf16.msra.mxu0 0
  %2141 = vmatprep.subr.bf16.mxu0 0
  %2142 = vmatpush1.bf16.msra.mxu0 0
  %2143 = vmatprep.subr.bf16.mxu0 0
  %2144 = vmatpush1.bf16.msra.mxu0 0
  %2145 = vmatprep.subr.bf16.mxu0 0
  %2146 = vmatpush1.bf16.msra.mxu0 0
  %2147 = vmatprep.subr.bf16.mxu0 0
  %2148 = vmatpush1.bf16.msra.mxu0 0
  %2149 = vmatprep.subr.bf16.mxu0 0
  %2150 = vmatpush1.bf16.msra.mxu0 0
  %2151 = vmatprep.subr.bf16.mxu0 0
  %2152 = vmatpush1.bf16.msra.mxu0 0
  %2153 = vmatprep.subr.bf16.mxu0 0
  %2154 = vmatpush1.bf16.msra.mxu0 0
  %2155 = vmatprep.subr.bf16.mxu0 0
  %2156 = vmatpush1.bf16.msra.mxu0 0
  %2157 = vmatprep.mubr.bf16.mxu0 0
  %2158 = vmatmul.mubr.bf16.gmra.mrb[0].mxu0 %v2123
  %v2159 = vpop.f32.mrb[0].mxu0
  %v2160 = vadd.f32 %v2114, %v2159
  %v2161 = vpop.f32.mrb[0].mxu0
  %v2162 = vpop.f32.mrb[0].mxu0
  %v2163 = vpop.f32.mrb[0].mxu0
  %2164 = vdwg.mxu0
  %2165 = vst [vmem:[%s14] sm:$0xff] %v2160
  // Predicated region
  $region58: #{classifier1_forward.1} parent=0 // pred_check
    _
  $region59: #{classifier1_forward.1} parent=0 // pred_check_branch
    %2167 = sbr.rel (0) target = $region61
  $region60: #{classifier1_forward.1} parent=0 // pred_region
    _
  $region61: #{classifier1_forward.1} parent=0 // pred_fallthru
    _
  // Predicated region
  $region62: #{classifier1_forward.1} parent=0 // pred_check
    _
  $region63: #{classifier1_forward.1} parent=0 // pred_check_branch
    %2169 = sbr.rel (0) target = $region65
  $region64: #{classifier1_forward.1} parent=0 // pred_region
    _
  $region65: #{classifier1_forward.1} parent=0 // pred_fallthru
    _

</llo_original>
